<compile_context>
chip_gen: v7x
topology: tpu7x:2x2x1
jax: 0.10.0
libtpu: 0.0.40
codegen_flags: <defaults>
</compile_context>

<pallas_src>
import functools

import jax
import jax.numpy as jnp
from jax.experimental import pallas as pl
from jax.experimental.pallas import tpu as pltpu

LN_EPS = 1e-6  # ONMT LayerNorm default


def _round_up(x, m):
    return ((x + m - 1) // m) * m


def _floor_multiple(x, m):
    return (x // m) * m


def _vmem_limit_bytes():
    """~3/4 of physical per-core VMEM (=> ~96 MiB on v5e/v6e, ~48 MiB on v7x)."""
    cap = 64 * 1024 * 1024  # conservative fallback = smallest known per-TC VMEM (v7x)
    try:
        info = pltpu.get_tpu_info()
        cap = int(getattr(info, "vmem_capacity_bytes", cap)) or cap
    except Exception:
        pass
    return (cap * 3) // 4


# ---------------------------------------------------------------------------
# Kernels
# ---------------------------------------------------------------------------
def ffn_kernel_resident(x_ref, gamma_ref, beta_ref, w1_ref, b1_ref, w2_ref, b2_ref, o_ref):
    """Weights fully VMEM-resident: one grid axis over row tiles, no d_ff tiling."""
    x = x_ref[...].astype(jnp.float32)
    mean = jnp.mean(x, axis=-1, keepdims=True)
    centered = x - mean
    var = jnp.mean(centered * centered, axis=-1, keepdims=True)
    inv = jax.lax.rsqrt(var + LN_EPS)
    normed = centered * inv * gamma_ref[...].astype(jnp.float32) \
        + beta_ref[...].astype(jnp.float32)

    # Linear 1 + bias + ReLU — bf16 MXU operands, f32 accumulation.
    h = jnp.dot(normed.astype(w1_ref.dtype), w1_ref[...],
                preferred_element_type=jnp.float32)
    h = jnp.maximum(h + b1_ref[...].astype(jnp.float32), 0.0)
    # dropout_1: identity (eval mode)

    # Linear 2 + bias + residual.
    out = jnp.dot(h.astype(w2_ref.dtype), w2_ref[...],
                  preferred_element_type=jnp.float32)
    out = out + b2_ref[...].astype(jnp.float32) + x
    # dropout_2: identity (eval mode)
    o_ref[...] = out.astype(o_ref.dtype)


def ffn_kernel_streamed(x_ref, gamma_ref, beta_ref, w1_ref, b1_ref, w2_ref, b2_ref,
                        o_ref, normed_ref, *acc_scratch):
    """d_ff streamed on grid axis 1; accumulate into o_ref (f32 out) or an f32 scratch."""
    acc_ref = acc_scratch[0] if acc_scratch else o_ref
    k = pl.program_id(1)
    nk = pl.num_programs(1)

    # k == 0: LayerNorm once per row tile (f32), cache it; init accumulator = residual + b2.
    @pl.when(k == 0)
    def _init():
        x = x_ref[...].astype(jnp.float32)
        mean = jnp.mean(x, axis=-1, keepdims=True)
        centered = x - mean
        var = jnp.mean(centered * centered, axis=-1, keepdims=True)
        inv = jax.lax.rsqrt(var + LN_EPS)
        normed = centered * inv * gamma_ref[...].astype(jnp.float32) \
            + beta_ref[...].astype(jnp.float32)
        normed_ref[...] = normed.astype(normed_ref.dtype)
        acc_ref[...] = x + b2_ref[...].astype(jnp.float32)

    # Linear 1 chunk + bias + ReLU, then Linear 2 chunk accumulated into the resident block.
    h = jnp.dot(normed_ref[...], w1_ref[...], preferred_element_type=jnp.float32)
    h = jnp.maximum(h + b1_ref[...].astype(jnp.float32), 0.0)
    # dropout_1 / dropout_2: identity (eval mode)
    acc_ref[...] += jnp.dot(h.astype(w2_ref.dtype), w2_ref[...],
                            preferred_element_type=jnp.float32)

    if acc_scratch:  # low-precision output: copy the f32 accumulator out on the last k step
        @pl.when(k == nk - 1)
        def _finalize():
            o_ref[...] = acc_ref[...].astype(o_ref.dtype)


# ---------------------------------------------------------------------------
# Wrapper
# ---------------------------------------------------------------------------
@functools.partial(jax.jit, static_argnames=("row_tile", "ff_tile", "compute_dtype",
                                             "force_stream", "use_buffered"))
def positionwise_ffn(x, gamma, beta, w1, b1, w2, b2, *,
                     row_tile=None, ff_tile=None, compute_dtype=jnp.bfloat16,
                     force_stream=False, use_buffered=True):
    B, S, d_model = x.shape
    d_ff = w1.shape[1]
    rows = B * S
    rows16 = _round_up(rows, 16)  # bf16 packs 16 rows per sublane tile

    x_item = jnp.dtype(x.dtype).itemsize
    out_item = x_item
    c_item = jnp.dtype(compute_dtype).itemsize

    vmem_limit = _vmem_limit_bytes()
    budget = vmem_limit - (2 * 1024 * 1024)  # headroom for Mosaic internal scratch

    single_buffer = bool(use_buffered and hasattr(pl, "Buffered"))

    # VMEM cost of keeping both weight matrices resident (+ small constant operands).
    weight_vmem = 2 * d_model * d_ff * c_item * (1 if single_buffer else 2)
    misc_vmem = (3 * d_model * 4 + d_ff * 4) * 2  # gamma/beta/b2 + b1, double-buffered

    # Per-row VMEM (bytes) in the resident configuration: x in (dbuf), out (dbuf),
    # LN f32 temps + bf16 normed value, transient (f32 + bf16) hidden activation.
    per_row_res = d_model * (2 * x_item + 2 * out_item + 4 + c_item) + d_ff * (4 + c_item)

    resident = (not force_stream) and (weight_vmem + misc_vmem <= budget // 2)

    x2d = x.reshape(rows, d_model)
    gamma2 = gamma.reshape(1, d_model).astype(jnp.float32)
    beta2 = beta.reshape(1, d_model).astype(jnp.float32)
    b2_2 = b2.reshape(1, d_model).astype(jnp.float32)
    w1c = w1.astype(compute_dtype)
    w2c = w2.astype(compute_dtype)
    b1f = b1.astype(jnp.float32)

    if resident:
        # ------------------ weight-resident fast path ------------------
        tm_cap = _floor_multiple(max((budget - weight_vmem - misc_vmem) // per_row_res, 16), 16)
        tm = max(16, min(row_tile if row_tile is not None else 512, rows16, tm_cap))
        rows_p = _round_up(rows, tm)
        if rows_p != rows:
            x2d = jnp.pad(x2d, ((0, rows_p - rows), (0, 0)))
        n_row_tiles = rows_p // tm
        b1_2 = b1f.reshape(1, d_ff)

        def wspec(shape, index_map):
            # Constant-index blocks never need a second pipeline buffer.
            if single_buffer:
                return pl.BlockSpec(shape, index_map, pipeline_mode=pl.Buffered(1))
            return pl.BlockSpec(shape, index_map)

        cost = pl.CostEstimate(
            flops=4 * rows_p * d_model * d_ff,
            transcendentals=rows_p,
            bytes_accessed=(rows_p * d_model * (x_item + out_item)
                            + 2 * d_model * d_ff * c_item          # W1 + W2 loaded once
                            + (3 * d_model + d_ff) * 4),
        )

        out2d = pl.pallas_call(
            ffn_kernel_resident,
            out_shape=jax.ShapeDtypeStruct((rows_p, d_model), x.dtype),
            grid_spec=pltpu.PrefetchScalarGridSpec(
                num_scalar_prefetch=0,
                grid=(n_row_tiles,),
                in_specs=[
                    pl.BlockSpec((tm, d_model), lambda i: (i, 0)),   # x rows
                    pl.BlockSpec((1, d_model), lambda i: (0, 0)),    # gamma
                    pl.BlockSpec((1, d_model), lambda i: (0, 0)),    # beta
                    wspec((d_model, d_ff), lambda i: (0, 0)),        # W1 (VMEM-resident)
                    wspec((1, d_ff), lambda i: (0, 0)),              # b1 (VMEM-resident)
                    wspec((d_ff, d_model), lambda i: (0, 0)),        # W2 (VMEM-resident)
                    pl.BlockSpec((1, d_model), lambda i: (0, 0)),    # b2
                ],
                out_specs=pl.BlockSpec((tm, d_model), lambda i: (i, 0)),
            ),
            compiler_params=pltpu.CompilerParams(
                dimension_semantics=("parallel",),
                vmem_limit_bytes=vmem_limit,
            ),
            cost_estimate=cost,
        )(x2d, gamma2, beta2, w1c, b1_2, w2c, b2_2)

    else:
        # ------------------ streamed d_ff path (very large d_ff) ------------------
        tff = ff_tile if ff_tile is not None else 512
        tff = min(tff, _round_up(d_ff, 256))
        assert tff % 256 == 0, "ff_tile must be a multiple of 256 (full MXU N/K on v6e/v7x)"
        dff_p = _round_up(d_ff, tff)

        acc_in_out = jnp.dtype(x.dtype) == jnp.dtype(jnp.float32)

        # Per-row VMEM: x in (dbuf), resident f32 accumulator + out, LN temps + bf16 normed
        # cache, transient hidden chunk.  Plus the streamed weight chunks (double-buffered).
        per_row_str = d_model * (2 * x_item + 2 * 4 + 4 + c_item) + tff * (4 + c_item)
        chunk_vmem = (2 * d_model * tff * c_item + tff * 4) * 2
        tm_cap = _floor_multiple(max((budget - chunk_vmem - misc_vmem) // per_row_str, 16), 16)
        tm = max(16, min(row_tile if row_tile is not None else 1024, rows16, tm_cap))
        rows_p = _round_up(rows, tm)
        if rows_p != rows:
            x2d = jnp.pad(x2d, ((0, rows_p - rows), (0, 0)))
        n_row_tiles = rows_p // tm
        n_ff_tiles = dff_p // tff

        # Zero-padding along d_ff is inert: ReLU(0 + 0) = 0 through zero W2 rows.
        if dff_p != d_ff:
            w1c = jnp.pad(w1c, ((0, 0), (0, dff_p - d_ff)))
            w2c = jnp.pad(w2c, ((0, dff_p - d_ff), (0, 0)))
            b1f = jnp.pad(b1f, ((0, dff_p - d_ff),))
        b1_2 = b1f.reshape(1, dff_p)

        scratch = [pltpu.VMEM((tm, d_model), compute_dtype)]  # cached LayerNorm output
        if not acc_in_out:
            scratch.append(pltpu.VMEM((tm, d_model), jnp.float32))  # f32 accumulator

        cost = pl.CostEstimate(
            flops=4 * rows_p * d_model * dff_p,
            transcendentals=rows_p,
            bytes_accessed=(rows_p * d_model * (x_item + out_item)
                            + n_row_tiles * 2 * d_model * dff_p * c_item   # streamed W1, W2
                            + (3 * d_model + dff_p) * 4),
        )

        out2d = pl.pallas_call(
            ffn_kernel_streamed,
            out_shape=jax.ShapeDtypeStruct((rows_p, d_model), x.dtype),
            grid_spec=pltpu.PrefetchScalarGridSpec(
                num_scalar_prefetch=0,
                grid=(n_row_tiles, n_ff_tiles),
                in_specs=[
                    pl.BlockSpec((tm, d_model), lambda i, k: (i, 0)),   # x rows (resident over k)
                    pl.BlockSpec((1, d_model), lambda i, k: (0, 0)),    # gamma
                    pl.BlockSpec((1, d_model), lambda i, k: (0, 0)),    # beta
                    pl.BlockSpec((d_model, tff), lambda i, k: (0, k)),  # W1 column chunk
                    pl.BlockSpec((1, tff), lambda i, k: (0, k)),        # b1 chunk
                    pl.BlockSpec((tff, d_model), lambda i, k: (k, 0)),  # W2 row chunk
                    pl.BlockSpec((1, d_model), lambda i, k: (0, 0)),    # b2
                ],
                out_specs=pl.BlockSpec((tm, d_model), lambda i, k: (i, 0)),
                scratch_shapes=scratch,
            ),
            compiler_params=pltpu.CompilerParams(
                dimension_semantics=("parallel", "arbitrary"),
                vmem_limit_bytes=vmem_limit,
            ),
            cost_estimate=cost,
        )(x2d, gamma2, beta2, w1c, b1_2, w2c, b2_2)

    return out2d[:rows].reshape(B, S, d_model)


def reference_ffn(x, gamma, beta, w1, b1, w2, b2):
    xf = x.astype(jnp.float32)
    mean = jnp.mean(xf, axis=-1, keepdims=True)
    var = jnp.mean((xf - mean) ** 2, axis=-1, keepdims=True)
    normed = (xf - mean) / jnp.sqrt(var + LN_EPS) * gamma + beta
    h = jnp.maximum(normed @ w1 + b1, 0.0)
    out = h @ w2 + b2
    return (out + xf).astype(x.dtype)


if __name__ == "__main__":
    # Small shapes implied by forward(): x is [batch_size, input_len, model_dim].
    # S=10 deliberately exercises row padding; the forced-stream run exercises d_ff tiling.
    B, S, d_model, d_ff = 2, 10, 128, 512

    key = jax.random.PRNGKey(0)
    kx, kg, kb, kw1, kb1, kw2, kb2 = jax.random.split(key, 7)

    x = jax.random.normal(kx, (B, S, d_model), dtype=jnp.float32)
    gamma = 1.0 + 0.1 * jax.random.normal(kg, (d_model,), jnp.float32)
    beta = 0.1 * jax.random.normal(kb, (d_model,), jnp.float32)
    w1 = jax.random.normal(kw1, (d_model, d_ff), jnp.float32) * (1.0 / d_model ** 0.5)
    b1 = jax.random.normal(kb1, (d_ff,), jnp.float32) * 0.01
    w2 = jax.random.normal(kw2, (d_ff, d_model), jnp.float32) * (1.0 / d_ff ** 0.5)
    b2 = jax.random.normal(kb2, (d_model,), jnp.float32) * 0.01

    ref = reference_ffn(x, gamma, beta, w1, b1, w2, b2)

    def run(**kwargs):
        try:
            return jax.block_until_ready(
                positionwise_ffn(x, gamma, beta, w1, b1, w2, b2, use_buffered=True, **kwargs))
        except Exception:
            # pl.Buffered(1) not supported by this jax/Mosaic build -> plain double-buffered specs.
            return jax.block_until_ready(
                positionwise_ffn(x, gamma, beta, w1, b1, w2, b2, use_buffered=False, **kwargs))

    # Weight-resident fast path (W1/W2 fit VMEM -> loaded once, reused by every row tile).
    out_resident = run()
    # Streamed d_ff path (exercised explicitly here; chosen automatically when weights don't fit).
    out_streamed = run(force_stream=True, ff_tile=256)

    for out in (out_resident, out_streamed):
        assert out.shape == (B, S, d_model)
        # bf16 MXU operands (f32 accumulation / LN / residual) => ~1e-2-level deviation vs f32 ref.
        assert jnp.allclose(out, ref, atol=5e-2, rtol=5e-2), float(jnp.max(jnp.abs(out - ref)))

    print("KERNEL_OK")
</pallas_src>

<mosaic_0001>
module attributes {stable_mosaic.version = 11 : i64} {
  func.func @ffn_kernel_resident(%arg0: i32, %arg1: memref<32x128xf32, #tpu.memory_space<vmem>>, %arg2: memref<1x128xf32, #tpu.memory_space<vmem>>, %arg3: memref<1x128xf32, #tpu.memory_space<vmem>>, %arg4: memref<128x512xbf16, #tpu.memory_space<vmem>>, %arg5: memref<1x512xf32, #tpu.memory_space<vmem>>, %arg6: memref<512x128xbf16, #tpu.memory_space<vmem>>, %arg7: memref<1x128xf32, #tpu.memory_space<vmem>>, %arg8: memref<32x128xf32, #tpu.memory_space<vmem>>) attributes {dimension_semantics = [#tpu.dimension_semantics<parallel>], iteration_bounds = array<i64: 1>, scalar_prefetch = 0 : i64, scratch_operands = 0 : i64, tpu.core_type = #tpu.core_type<tc>, window_params = [{transform_indices = @transform_0, window_bounds = array<i64: 32, 128>}, {pipeline_mode = #tpu.pipeline_mode<synchronous>, transform_indices = @transform_1, window_bounds = array<i64: 1, 128>}, {pipeline_mode = #tpu.pipeline_mode<synchronous>, transform_indices = @transform_2, window_bounds = array<i64: 1, 128>}, {pipeline_mode = #tpu.pipeline_mode<synchronous>, transform_indices = @transform_3, window_bounds = array<i64: 128, 512>}, {pipeline_mode = #tpu.pipeline_mode<synchronous>, transform_indices = @transform_4, window_bounds = array<i64: 1, 512>}, {pipeline_mode = #tpu.pipeline_mode<synchronous>, transform_indices = @transform_5, window_bounds = array<i64: 512, 128>}, {pipeline_mode = #tpu.pipeline_mode<synchronous>, transform_indices = @transform_6, window_bounds = array<i64: 1, 128>}, {transform_indices = @transform_7, window_bounds = array<i64: 32, 128>}]} {
    %c0 = arith.constant 0 : index
    %c0_0 = arith.constant 0 : index
    %0 = vector.load %arg1[%c0, %c0_0] : memref<32x128xf32, #tpu.memory_space<vmem>>, vector<32x128xf32>
    %cst = arith.constant dense<0.000000e+00> : vector<32xf32>
    %1 = vector.multi_reduction <add>, %0, %cst [1] : vector<32x128xf32> to vector<32xf32>
    %2 = vector.shape_cast %1 : vector<32xf32> to vector<32x1xf32>
    %cst_1 = arith.constant 1.280000e+02 : f32
    %3 = vector.broadcast %cst_1 : f32 to vector<32x1xf32>
    %4 = arith.divf %2, %3 : vector<32x1xf32>
    %5 = vector.broadcast %4 : vector<32x1xf32> to vector<32x128xf32>
    %6 = arith.subf %0, %5 : vector<32x128xf32>
    %7 = arith.mulf %6, %6 : vector<32x128xf32>
    %cst_2 = arith.constant dense<0.000000e+00> : vector<32xf32>
    %8 = vector.multi_reduction <add>, %7, %cst_2 [1] : vector<32x128xf32> to vector<32xf32>
    %9 = vector.shape_cast %8 : vector<32xf32> to vector<32x1xf32>
    %cst_3 = arith.constant 1.280000e+02 : f32
    %10 = vector.broadcast %cst_3 : f32 to vector<32x1xf32>
    %11 = arith.divf %9, %10 : vector<32x1xf32>
    %cst_4 = arith.constant 9.99999997E-7 : f32
    %12 = vector.broadcast %cst_4 : f32 to vector<32x1xf32>
    %13 = arith.addf %11, %12 : vector<32x1xf32>
    %14 = math.rsqrt %13 : vector<32x1xf32>
    %15 = vector.broadcast %14 : vector<32x1xf32> to vector<32x128xf32>
    %16 = arith.mulf %6, %15 : vector<32x128xf32>
    %c0_5 = arith.constant 0 : index
    %c0_6 = arith.constant 0 : index
    %17 = vector.load %arg2[%c0_5, %c0_6] : memref<1x128xf32, #tpu.memory_space<vmem>>, vector<1x128xf32>
    %18 = vector.broadcast %17 : vector<1x128xf32> to vector<32x128xf32>
    %19 = arith.mulf %16, %18 : vector<32x128xf32>
    %c0_7 = arith.constant 0 : index
    %c0_8 = arith.constant 0 : index
    %20 = vector.load %arg3[%c0_7, %c0_8] : memref<1x128xf32, #tpu.memory_space<vmem>>, vector<1x128xf32>
    %21 = vector.broadcast %20 : vector<1x128xf32> to vector<32x128xf32>
    %22 = arith.addf %19, %21 : vector<32x128xf32>
    %23 = arith.truncf %22 : vector<32x128xf32> to vector<32x128xbf16>
    %c0_9 = arith.constant 0 : index
    %c0_10 = arith.constant 0 : index
    %24 = vector.load %arg4[%c0_9, %c0_10] : memref<128x512xbf16, #tpu.memory_space<vmem>>, vector<128x512xbf16>
    %cst_11 = arith.constant dense<0.000000e+00> : vector<32x512xf32>
    %25 = tpu.matmul %23, %24, %cst_11 {dimension_numbers = #tpu.dot_dimension_numbers<[1], [0], [0], [1], [0, 0, 1, 1], [], []>} : vector<32x128xbf16>, vector<128x512xbf16>, vector<32x512xf32> -> vector<32x512xf32>
    %c0_12 = arith.constant 0 : index
    %c0_13 = arith.constant 0 : index
    %26 = vector.load %arg5[%c0_12, %c0_13] : memref<1x512xf32, #tpu.memory_space<vmem>>, vector<1x512xf32>
    %27 = vector.broadcast %26 : vector<1x512xf32> to vector<32x512xf32>
    %28 = arith.addf %25, %27 : vector<32x512xf32>
    %cst_14 = arith.constant 0.000000e+00 : f32
    %29 = vector.broadcast %cst_14 : f32 to vector<32x512xf32>
    %30 = arith.maximumf %28, %29 : vector<32x512xf32>
    %31 = arith.truncf %30 : vector<32x512xf32> to vector<32x512xbf16>
    %c0_15 = arith.constant 0 : index
    %c0_16 = arith.constant 0 : index
    %32 = vector.load %arg6[%c0_15, %c0_16] : memref<512x128xbf16, #tpu.memory_space<vmem>>, vector<512x128xbf16>
    %cst_17 = arith.constant dense<0.000000e+00> : vector<32x128xf32>
    %33 = tpu.matmul %31, %32, %cst_17 {dimension_numbers = #tpu.dot_dimension_numbers<[1], [0], [0], [1], [0, 0, 1, 1], [], []>} : vector<32x512xbf16>, vector<512x128xbf16>, vector<32x128xf32> -> vector<32x128xf32>
    %c0_18 = arith.constant 0 : index
    %c0_19 = arith.constant 0 : index
    %34 = vector.load %arg7[%c0_18, %c0_19] : memref<1x128xf32, #tpu.memory_space<vmem>>, vector<1x128xf32>
    %35 = vector.broadcast %34 : vector<1x128xf32> to vector<32x128xf32>
    %36 = arith.addf %33, %35 : vector<32x128xf32>
    %37 = arith.addf %36, %0 : vector<32x128xf32>
    %c0_20 = arith.constant 0 : index
    %c0_21 = arith.constant 0 : index
    %38 = vector.load %arg8[%c0_20, %c0_21] : memref<32x128xf32, #tpu.memory_space<vmem>>, vector<32x128xf32>
    tpu.vector_store %arg8[%c0_20, %c0_21], %37 {strides = array<i32>} : memref<32x128xf32, #tpu.memory_space<vmem>>, vector<32x128xf32>,
    return
  }
  func.func @transform_0(%arg0: i32) -> (i32, i32) {
    %c0_i32 = arith.constant 0 : i32
    %c0_i32_0 = arith.constant 0 : i32
    return %arg0, %c0_i32 : i32, i32
  }
  func.func @transform_1(%arg0: i32) -> (i32, i32) {
    %c0_i32 = arith.constant 0 : i32
    %c0_i32_0 = arith.constant 0 : i32
    %c0_i32_1 = arith.constant 0 : i32
    return %c0_i32, %c0_i32_0 : i32, i32
  }
  func.func @transform_2(%arg0: i32) -> (i32, i32) {
    %c0_i32 = arith.constant 0 : i32
    %c0_i32_0 = arith.constant 0 : i32
    %c0_i32_1 = arith.constant 0 : i32
    return %c0_i32, %c0_i32_0 : i32, i32
  }
  func.func @transform_3(%arg0: i32) -> (i32, i32) {
    %c0_i32 = arith.constant 0 : i32
    %c0_i32_0 = arith.constant 0 : i32
    %c0_i32_1 = arith.constant 0 : i32
    return %c0_i32, %c0_i32_0 : i32, i32
  }
  func.func @transform_4(%arg0: i32) -> (i32, i32) {
    %c0_i32 = arith.constant 0 : i32
    %c0_i32_0 = arith.constant 0 : i32
    %c0_i32_1 = arith.constant 0 : i32
    return %c0_i32, %c0_i32_0 : i32, i32
  }
  func.func @transform_5(%arg0: i32) -> (i32, i32) {
    %c0_i32 = arith.constant 0 : i32
    %c0_i32_0 = arith.constant 0 : i32
    %c0_i32_1 = arith.constant 0 : i32
    return %c0_i32, %c0_i32_0 : i32, i32
  }
  func.func @transform_6(%arg0: i32) -> (i32, i32) {
    %c0_i32 = arith.constant 0 : i32
    %c0_i32_0 = arith.constant 0 : i32
    %c0_i32_1 = arith.constant 0 : i32
    return %c0_i32, %c0_i32_0 : i32, i32
  }
  func.func @transform_7(%arg0: i32) -> (i32, i32) {
    %c0_i32 = arith.constant 0 : i32
    %c0_i32_0 = arith.constant 0 : i32
    return %arg0, %c0_i32 : i32, i32
  }
}

module attributes {stable_mosaic.version = 11 : i64} {
  func.func @ffn_kernel_resident(%arg0: i32, %arg1: memref<32x128xf32, #tpu.memory_space<vmem>>, %arg2: memref<1x128xf32, #tpu.memory_space<vmem>>, %arg3: memref<1x128xf32, #tpu.memory_space<vmem>>, %arg4: memref<128x512xbf16, #tpu.memory_space<vmem>>, %arg5: memref<1x512xf32, #tpu.memory_space<vmem>>, %arg6: memref<512x128xbf16, #tpu.memory_space<vmem>>, %arg7: memref<1x128xf32, #tpu.memory_space<vmem>>, %arg8: memref<32x128xf32, #tpu.memory_space<vmem>>) attributes {dimension_semantics = [#tpu.dimension_semantics<parallel>], iteration_bounds = array<i64: 1>, scalar_prefetch = 0 : i64, scratch_operands = 0 : i64, tpu.core_type = #tpu.core_type<tc>, window_params = [{transform_indices = @transform_0, window_bounds = array<i64: 32, 128>}, {pipeline_mode = #tpu.pipeline_mode<synchronous>, transform_indices = @transform_1, window_bounds = array<i64: 1, 128>}, {pipeline_mode = #tpu.pipeline_mode<synchronous>, transform_indices = @transform_2, window_bounds = array<i64: 1, 128>}, {pipeline_mode = #tpu.pipeline_mode<synchronous>, transform_indices = @transform_3, window_bounds = array<i64: 128, 512>}, {pipeline_mode = #tpu.pipeline_mode<synchronous>, transform_indices = @transform_4, window_bounds = array<i64: 1, 512>}, {pipeline_mode = #tpu.pipeline_mode<synchronous>, transform_indices = @transform_5, window_bounds = array<i64: 512, 128>}, {pipeline_mode = #tpu.pipeline_mode<synchronous>, transform_indices = @transform_6, window_bounds = array<i64: 1, 128>}, {transform_indices = @transform_7, window_bounds = array<i64: 32, 128>}]} {
    %c0 = arith.constant 0 : index
    %c0_0 = arith.constant 0 : index
    %0 = vector.load %arg1[%c0, %c0_0] : memref<32x128xf32, #tpu.memory_space<vmem>>, vector<32x128xf32>
    %cst = arith.constant dense<0.000000e+00> : vector<32xf32>
    %1 = vector.multi_reduction <add>, %0, %cst [1] : vector<32x128xf32> to vector<32xf32>
    %2 = vector.shape_cast %1 : vector<32xf32> to vector<32x1xf32>
    %cst_1 = arith.constant 1.280000e+02 : f32
    %3 = vector.broadcast %cst_1 : f32 to vector<32x1xf32>
    %4 = arith.divf %2, %3 : vector<32x1xf32>
    %5 = vector.broadcast %4 : vector<32x1xf32> to vector<32x128xf32>
    %6 = arith.subf %0, %5 : vector<32x128xf32>
    %7 = arith.mulf %6, %6 : vector<32x128xf32>
    %cst_2 = arith.constant dense<0.000000e+00> : vector<32xf32>
    %8 = vector.multi_reduction <add>, %7, %cst_2 [1] : vector<32x128xf32> to vector<32xf32>
    %9 = vector.shape_cast %8 : vector<32xf32> to vector<32x1xf32>
    %cst_3 = arith.constant 1.280000e+02 : f32
    %10 = vector.broadcast %cst_3 : f32 to vector<32x1xf32>
    %11 = arith.divf %9, %10 : vector<32x1xf32>
    %cst_4 = arith.constant 9.99999997E-7 : f32
    %12 = vector.broadcast %cst_4 : f32 to vector<32x1xf32>
    %13 = arith.addf %11, %12 : vector<32x1xf32>
    %14 = math.rsqrt %13 : vector<32x1xf32>
    %15 = vector.broadcast %14 : vector<32x1xf32> to vector<32x128xf32>
    %16 = arith.mulf %6, %15 : vector<32x128xf32>
    %c0_5 = arith.constant 0 : index
    %c0_6 = arith.constant 0 : index
    %17 = vector.load %arg2[%c0_5, %c0_6] : memref<1x128xf32, #tpu.memory_space<vmem>>, vector<1x128xf32>
    %18 = vector.broadcast %17 : vector<1x128xf32> to vector<32x128xf32>
    %19 = arith.mulf %16, %18 : vector<32x128xf32>
    %c0_7 = arith.constant 0 : index
    %c0_8 = arith.constant 0 : index
    %20 = vector.load %arg3[%c0_7, %c0_8] : memref<1x128xf32, #tpu.memory_space<vmem>>, vector<1x128xf32>
    %21 = vector.broadcast %20 : vector<1x128xf32> to vector<32x128xf32>
    %22 = arith.addf %19, %21 : vector<32x128xf32>
    %23 = arith.truncf %22 : vector<32x128xf32> to vector<32x128xbf16>
    %c0_9 = arith.constant 0 : index
    %c0_10 = arith.constant 0 : index
    %24 = vector.load %arg4[%c0_9, %c0_10] : memref<128x512xbf16, #tpu.memory_space<vmem>>, vector<128x512xbf16>
    %cst_11 = arith.constant dense<0.000000e+00> : vector<32x512xf32>
    %25 = tpu.matmul %23, %24, %cst_11 {dimension_numbers = #tpu.dot_dimension_numbers<[1], [0], [0], [1], [0, 0, 1, 1], [], []>} : vector<32x128xbf16>, vector<128x512xbf16>, vector<32x512xf32> -> vector<32x512xf32>
    %c0_12 = arith.constant 0 : index
    %c0_13 = arith.constant 0 : index
    %26 = vector.load %arg5[%c0_12, %c0_13] : memref<1x512xf32, #tpu.memory_space<vmem>>, vector<1x512xf32>
    %27 = vector.broadcast %26 : vector<1x512xf32> to vector<32x512xf32>
    %28 = arith.addf %25, %27 : vector<32x512xf32>
    %cst_14 = arith.constant 0.000000e+00 : f32
    %29 = vector.broadcast %cst_14 : f32 to vector<32x512xf32>
    %30 = arith.maximumf %28, %29 : vector<32x512xf32>
    %31 = arith.truncf %30 : vector<32x512xf32> to vector<32x512xbf16>
    %c0_15 = arith.constant 0 : index
    %c0_16 = arith.constant 0 : index
    %32 = vector.load %arg6[%c0_15, %c0_16] : memref<512x128xbf16, #tpu.memory_space<vmem>>, vector<512x128xbf16>
    %cst_17 = arith.constant dense<0.000000e+00> : vector<32x128xf32>
    %33 = tpu.matmul %31, %32, %cst_17 {dimension_numbers = #tpu.dot_dimension_numbers<[1], [0], [0], [1], [0, 0, 1, 1], [], []>} : vector<32x512xbf16>, vector<512x128xbf16>, vector<32x128xf32> -> vector<32x128xf32>
    %c0_18 = arith.constant 0 : index
    %c0_19 = arith.constant 0 : index
    %34 = vector.load %arg7[%c0_18, %c0_19] : memref<1x128xf32, #tpu.memory_space<vmem>>, vector<1x128xf32>
    %35 = vector.broadcast %34 : vector<1x128xf32> to vector<32x128xf32>
    %36 = arith.addf %33, %35 : vector<32x128xf32>
    %37 = arith.addf %36, %0 : vector<32x128xf32>
    %c0_20 = arith.constant 0 : index
    %c0_21 = arith.constant 0 : index
    %38 = vector.load %arg8[%c0_20, %c0_21] : memref<32x128xf32, #tpu.memory_space<vmem>>, vector<32x128xf32>
    tpu.vector_store %arg8[%c0_20, %c0_21], %37 {strides = array<i32>} : memref<32x128xf32, #tpu.memory_space<vmem>>, vector<32x128xf32>,
    return
  }
  func.func @transform_0(%arg0: i32) -> (i32, i32) {
    %c0_i32 = arith.constant 0 : i32
    %c0_i32_0 = arith.constant 0 : i32
    return %arg0, %c0_i32 : i32, i32
  }
  func.func @transform_1(%arg0: i32) -> (i32, i32) {
    %c0_i32 = arith.constant 0 : i32
    %c0_i32_0 = arith.constant 0 : i32
    %c0_i32_1 = arith.constant 0 : i32
    return %c0_i32, %c0_i32_0 : i32, i32
  }
  func.func @transform_2(%arg0: i32) -> (i32, i32) {
    %c0_i32 = arith.constant 0 : i32
    %c0_i32_0 = arith.constant 0 : i32
    %c0_i32_1 = arith.constant 0 : i32
    return %c0_i32, %c0_i32_0 : i32, i32
  }
  func.func @transform_3(%arg0: i32) -> (i32, i32) {
    %c0_i32 = arith.constant 0 : i32
    %c0_i32_0 = arith.constant 0 : i32
    %c0_i32_1 = arith.constant 0 : i32
    return %c0_i32, %c0_i32_0 : i32, i32
  }
  func.func @transform_4(%arg0: i32) -> (i32, i32) {
    %c0_i32 = arith.constant 0 : i32
    %c0_i32_0 = arith.constant 0 : i32
    %c0_i32_1 = arith.constant 0 : i32
    return %c0_i32, %c0_i32_0 : i32, i32
  }
  func.func @transform_5(%arg0: i32) -> (i32, i32) {
    %c0_i32 = arith.constant 0 : i32
    %c0_i32_0 = arith.constant 0 : i32
    %c0_i32_1 = arith.constant 0 : i32
    return %c0_i32, %c0_i32_0 : i32, i32
  }
  func.func @transform_6(%arg0: i32) -> (i32, i32) {
    %c0_i32 = arith.constant 0 : i32
    %c0_i32_0 = arith.constant 0 : i32
    %c0_i32_1 = arith.constant 0 : i32
    return %c0_i32, %c0_i32_0 : i32, i32
  }
  func.func @transform_7(%arg0: i32) -> (i32, i32) {
    %c0_i32 = arith.constant 0 : i32
    %c0_i32_0 = arith.constant 0 : i32
    return %arg0, %c0_i32 : i32, i32
  }
}

</mosaic_0001>

<llo_original>
// kernel: positionwise_ffn.1
$region0: #{positionwise_ffn.1}
  #allocation0 [shape = 'u32[]', space=smem, size = 0x4, offset = 0x4, fixed_abs, tag = 'smem constant byte address 0x4 - core index']
  #allocation1 [shape = 'u32[144,128]{1,0:T(1,128)}', space=vmem, size = 0x12000, scoped, tag = 'internal scratch']
  %s0 = inlined_call_operand.vmem [shape: f32[32,128], index: 0, kind: input, shape index: {}]
  %s1 = inlined_call_operand.vmem [shape: f32[1,128], index: 1, kind: input, shape index: {}]
  %s2 = inlined_call_operand.vmem [shape: f32[1,128], index: 2, kind: input, shape index: {}]
  %s3 = inlined_call_operand.vmem [shape: bf16[128,512], index: 3, kind: input, shape index: {}]
  %s4 = inlined_call_operand.vmem [shape: f32[1,512], index: 4, kind: input, shape index: {}]
  %s5 = inlined_call_operand.vmem [shape: bf16[512,128], index: 5, kind: input, shape index: {}]
  %s6 = inlined_call_operand.vmem [shape: f32[1,128], index: 6, kind: input, shape index: {}]
  %s7 = inlined_call_operand.vmem [shape: f32[32,128], index: 7, kind: output, shape index: {}]
  %s8 = sld [smem:[#allocation0]]
  $region38: #{positionwise_ffn.1} parent=0
    _
  %s10 = ssub.s32 1, %s8
  %s11 = scalar_select 0, %s10, %s8
  // Predicated region
  $region2: #{positionwise_ffn.1} parent=0 // pred_check
    _
  $region3: #{positionwise_ffn.1} parent=0 // pred_check_branch
    %13 = sbr.rel (0) target = $region5
  $region4: #{positionwise_ffn.1} parent=0 // pred_region
    _
  $region5: #{positionwise_ffn.1} parent=0 // pred_fallthru
    _
  // Predicated region
  $region6: #{positionwise_ffn.1} parent=0 // pred_check
    _
  $region7: #{positionwise_ffn.1} parent=0 // pred_check_branch
    %15 = sbr.rel (0) target = $region9
  $region8: #{positionwise_ffn.1} parent=0 // pred_region
    _
  $region9: #{positionwise_ffn.1} parent=0 // pred_fallthru
    _
  // Predicated region
  $region10: #{positionwise_ffn.1} parent=0 // pred_check
    _
  $region11: #{positionwise_ffn.1} parent=0 // pred_check_branch
    %17 = sbr.rel (0) target = $region13
  $region12: #{positionwise_ffn.1} parent=0 // pred_region
    _
  $region13: #{positionwise_ffn.1} parent=0 // pred_fallthru
    _
  // Predicated region
  $region14: #{positionwise_ffn.1} parent=0 // pred_check
    _
  $region15: #{positionwise_ffn.1} parent=0 // pred_check_branch
    %19 = sbr.rel (0) target = $region17
  $region16: #{positionwise_ffn.1} parent=0 // pred_region
    _
  $region17: #{positionwise_ffn.1} parent=0 // pred_fallthru
    _
  // Predicated region
  $region18: #{positionwise_ffn.1} parent=0 // pred_check
    _
  $region19: #{positionwise_ffn.1} parent=0 // pred_check_branch
    %21 = sbr.rel (0) target = $region21
  $region20: #{positionwise_ffn.1} parent=0 // pred_region
    _
  $region21: #{positionwise_ffn.1} parent=0 // pred_fallthru
    _
  // Predicated region
  $region22: #{positionwise_ffn.1} parent=0 // pred_check
    _
  $region23: #{positionwise_ffn.1} parent=0 // pred_check_branch
    %23 = sbr.rel (0) target = $region25
  $region24: #{positionwise_ffn.1} parent=0 // pred_region
    _
  $region25: #{positionwise_ffn.1} parent=0 // pred_fallthru
    _
  // Predicated region
  $region26: #{positionwise_ffn.1} parent=0 // pred_check
    _
  $region27: #{positionwise_ffn.1} parent=0 // pred_check_branch
    %25 = sbr.rel (0) target = $region29
  $region28: #{positionwise_ffn.1} parent=0 // pred_region
    _
  $region29: #{positionwise_ffn.1} parent=0 // pred_fallthru
    _
  %v27 = vld [vmem:[%s0] sm:$0xff]
  %v28 = vld [vmem:[%s0 + $0x8] sm:$0xff]
  %v29 = vld [vmem:[%s0 + $0x10] sm:$0xff]
  %v30 = vld [vmem:[%s0 + $0x18] sm:$0xff]
  %31 = vadd.xlane.f32.xlu0 %v27
  %v32 = vpop.xlane.xlu0 %31
  %33 = vadd.xlane.f32.xlu0 %v28
  %v34 = vpop.xlane.xlu0 %33
  %35 = vadd.xlane.f32.xlu0 %v29
  %v36 = vpop.xlane.xlu0 %35
  %37 = vadd.xlane.f32.xlu0 %v30
  %v38 = vpop.xlane.xlu0 %37
  %v39 = vrcp.pop 128.0
  %v40 = vmul.f32 %v32, %v39
  %v41 = vmul.f32 %v34, %v39
  %v42 = vmul.f32 %v36, %v39
  %v43 = vmul.f32 %v38, %v39
  %v44 = vsub.f32 %v27, %v40
  %v45 = vsub.f32 %v28, %v41
  %v46 = vsub.f32 %v29, %v42
  %v47 = vsub.f32 %v30, %v43
  %v48 = vmul.f32 %v44, %v44
  %v49 = vmul.f32 %v45, %v45
  %v50 = vmul.f32 %v46, %v46
  %v51 = vmul.f32 %v47, %v47
  %52 = vadd.xlane.f32.xlu0 %v48
  %v53 = vpop.xlane.xlu0 %52
  %54 = vadd.xlane.f32.xlu0 %v49
  %v55 = vpop.xlane.xlu0 %54
  %56 = vadd.xlane.f32.xlu0 %v50
  %v57 = vpop.xlane.xlu0 %56
  %58 = vadd.xlane.f32.xlu0 %v51
  %v59 = vpop.xlane.xlu0 %58
  %v60 = vmul.f32 %v53, %v39
  %v61 = vmul.f32 %v55, %v39
  %v62 = vmul.f32 %v57, %v39
  %v63 = vmul.f32 %v59, %v39
  %v64 = vadd.f32 %v60, 1e-06
  %v65 = vadd.f32 %v61, 1e-06
  %v66 = vadd.f32 %v62, 1e-06
  %v67 = vadd.f32 %v63, 1e-06
  %v68 = vrsqrt.pop %v64
  %v69 = vrsqrt.pop %v65
  %v70 = vrsqrt.pop %v66
  %v71 = vrsqrt.pop %v67
  %v72 = vmul.f32 %v44, %v68
  %v73 = vmul.f32 %v45, %v69
  %v74 = vmul.f32 %v46, %v70
  %v75 = vmul.f32 %v47, %v71
  %v76 = vld [vmem:[%s1] sm:$0x1]
  %v78 = vlaneseq
  %v79 = vshrl.u32 %v78, 7
  %v80 = vsub.s32 0, %v79
  %v81 = vrot.slane %v76, %v80
  %v83 = vmul.f32 %v72, %v81
  %v84 = vmul.f32 %v73, %v81
  %v85 = vmul.f32 %v74, %v81
  %v86 = vmul.f32 %v75, %v81
  %v87 = vld [vmem:[%s2] sm:$0x1]
  %v89 = vlaneseq
  %v90 = vshrl.u32 %v89, 7
  %v91 = vsub.s32 0, %v90
  %v92 = vrot.slane %v87, %v91
  %v94 = vadd.f32 %v83, %v92
  %v95 = vadd.f32 %v84, %v92
  %v96 = vadd.f32 %v85, %v92
  %v97 = vadd.f32 %v86, %v92
  %v98 = vpack.c.bf16 %v95, %v94
  %v99 = vpack.c.bf16 %v97, %v96
  %v100 = vld [vmem:[%s3] sm:$0xff]
  %v101 = vld [vmem:[%s3 + $0x8] sm:$0xff]
  %v102 = vld [vmem:[%s3 + $0x10] sm:$0xff]
  %v103 = vld [vmem:[%s3 + $0x18] sm:$0xff]
  %v104 = vld [vmem:[%s3 + $0x20] sm:$0xff]
  %v105 = vld [vmem:[%s3 + $0x28] sm:$0xff]
  %v106 = vld [vmem:[%s3 + $0x30] sm:$0xff]
  %v107 = vld [vmem:[%s3 + $0x38] sm:$0xff]
  %v108 = vld [vmem:[%s3 + $0x40] sm:$0xff]
  %v109 = vld [vmem:[%s3 + $0x48] sm:$0xff]
  %v110 = vld [vmem:[%s3 + $0x50] sm:$0xff]
  %v111 = vld [vmem:[%s3 + $0x58] sm:$0xff]
  %v112 = vld [vmem:[%s3 + $0x60] sm:$0xff]
  %v113 = vld [vmem:[%s3 + $0x68] sm:$0xff]
  %v114 = vld [vmem:[%s3 + $0x70] sm:$0xff]
  %v115 = vld [vmem:[%s3 + $0x78] sm:$0xff]
  %v116 = vld [vmem:[%s3 + $0x80] sm:$0xff]
  %v117 = vld [vmem:[%s3 + $0x88] sm:$0xff]
  %v118 = vld [vmem:[%s3 + $0x90] sm:$0xff]
  %v119 = vld [vmem:[%s3 + $0x98] sm:$0xff]
  %v120 = vld [vmem:[%s3 + $0xa0] sm:$0xff]
  %v121 = vld [vmem:[%s3 + $0xa8] sm:$0xff]
  %v122 = vld [vmem:[%s3 + $0xb0] sm:$0xff]
  %v123 = vld [vmem:[%s3 + $0xb8] sm:$0xff]
  %v124 = vld [vmem:[%s3 + $0xc0] sm:$0xff]
  %v125 = vld [vmem:[%s3 + $0xc8] sm:$0xff]
  %v126 = vld [vmem:[%s3 + $0xd0] sm:$0xff]
  %v127 = vld [vmem:[%s3 + $0xd8] sm:$0xff]
  %v128 = vld [vmem:[%s3 + $0xe0] sm:$0xff]
  %v129 = vld [vmem:[%s3 + $0xe8] sm:$0xff]
  %v130 = vld [vmem:[%s3 + $0xf0] sm:$0xff]
  %v131 = vld [vmem:[%s3 + $0xf8] sm:$0xff]
  %v132 = vld [vmem:[%s4] sm:$0xf]
  %v134 = vlaneseq
  %v135 = vshrl.u32 %v134, 7
  %v136 = vsub.s32 0, %v135
  %v137 = vrot.slane %v132, %v136
  %v138 = vlaneseq
  %v139 = vshrl.u32 %v138, 7
  %v140 = vsub.s32 1, %v139
  %v141 = vrot.slane %v132, %v140
  %v142 = vlaneseq
  %v143 = vshrl.u32 %v142, 7
  %v144 = vsub.s32 2, %v143
  %v145 = vrot.slane %v132, %v144
  %v146 = vlaneseq
  %v147 = vshrl.u32 %v146, 7
  %v148 = vsub.s32 3, %v147
  %v149 = vrot.slane %v132, %v148
  %v186 = vunpack.c.l.b16 %v100
  %v187 = vunpack.c.h.b16 %v100
  %v188 = vunpack.c.l.b16 %v101
  %v189 = vunpack.c.h.b16 %v101
  %v190 = vunpack.c.l.b16 %v102
  %v191 = vunpack.c.h.b16 %v102
  %v192 = vunpack.c.l.b16 %v103
  %v193 = vunpack.c.h.b16 %v103
  %v194 = vunpack.c.l.b16 %v104
  %v195 = vunpack.c.h.b16 %v104
  %v196 = vunpack.c.l.b16 %v105
  %v197 = vunpack.c.h.b16 %v105
  %v198 = vunpack.c.l.b16 %v106
  %v199 = vunpack.c.h.b16 %v106
  %v200 = vunpack.c.l.b16 %v107
  %v201 = vunpack.c.h.b16 %v107
  %v202 = vunpack.c.l.b16 %v108
  %v203 = vunpack.c.h.b16 %v108
  %v204 = vunpack.c.l.b16 %v109
  %v205 = vunpack.c.h.b16 %v109
  %v206 = vunpack.c.l.b16 %v110
  %v207 = vunpack.c.h.b16 %v110
  %v208 = vunpack.c.l.b16 %v111
  %v209 = vunpack.c.h.b16 %v111
  %v210 = vunpack.c.l.b16 %v112
  %v211 = vunpack.c.h.b16 %v112
  %v212 = vunpack.c.l.b16 %v113
  %v213 = vunpack.c.h.b16 %v113
  %v214 = vunpack.c.l.b16 %v114
  %v215 = vunpack.c.h.b16 %v114
  %v216 = vunpack.c.l.b16 %v115
  %v217 = vunpack.c.h.b16 %v115
  %v218 = vunpack.c.l.b16 %v116
  %v219 = vunpack.c.h.b16 %v116
  %v220 = vunpack.c.l.b16 %v117
  %v221 = vunpack.c.h.b16 %v117
  %v222 = vunpack.c.l.b16 %v118
  %v223 = vunpack.c.h.b16 %v118
  %v224 = vunpack.c.l.b16 %v119
  %v225 = vunpack.c.h.b16 %v119
  %v226 = vunpack.c.l.b16 %v120
  %v227 = vunpack.c.h.b16 %v120
  %v228 = vunpack.c.l.b16 %v121
  %v229 = vunpack.c.h.b16 %v121
  %v230 = vunpack.c.l.b16 %v122
  %v231 = vunpack.c.h.b16 %v122
  %v232 = vunpack.c.l.b16 %v123
  %v233 = vunpack.c.h.b16 %v123
  %v234 = vunpack.c.l.b16 %v124
  %v235 = vunpack.c.h.b16 %v124
  %v236 = vunpack.c.l.b16 %v125
  %v237 = vunpack.c.h.b16 %v125
  %v238 = vunpack.c.l.b16 %v126
  %v239 = vunpack.c.h.b16 %v126
  %v240 = vunpack.c.l.b16 %v127
  %v241 = vunpack.c.h.b16 %v127
  %v242 = vunpack.c.l.b16 %v128
  %v243 = vunpack.c.h.b16 %v128
  %v244 = vunpack.c.l.b16 %v129
  %v245 = vunpack.c.h.b16 %v129
  %v246 = vunpack.c.l.b16 %v130
  %v247 = vunpack.c.h.b16 %v130
  %v248 = vunpack.c.l.b16 %v131
  %v249 = vunpack.c.h.b16 %v131
  %v250 = vpack.c.b16 %v190, %v186
  %v251 = vpack.c.b16 %v191, %v187
  %v252 = vpack.c.b16 %v192, %v188
  %v253 = vpack.c.b16 %v193, %v189
  %v254 = vpack.c.b16 %v198, %v194
  %v255 = vpack.c.b16 %v199, %v195
  %v256 = vpack.c.b16 %v200, %v196
  %v257 = vpack.c.b16 %v201, %v197
  %v258 = vpack.c.b16 %v206, %v202
  %v259 = vpack.c.b16 %v207, %v203
  %v260 = vpack.c.b16 %v208, %v204
  %v261 = vpack.c.b16 %v209, %v205
  %v262 = vpack.c.b16 %v214, %v210
  %v263 = vpack.c.b16 %v215, %v211
  %v264 = vpack.c.b16 %v216, %v212
  %v265 = vpack.c.b16 %v217, %v213
  %v266 = vpack.c.b16 %v222, %v218
  %v267 = vpack.c.b16 %v223, %v219
  %v268 = vpack.c.b16 %v224, %v220
  %v269 = vpack.c.b16 %v225, %v221
  %v270 = vpack.c.b16 %v230, %v226
  %v271 = vpack.c.b16 %v231, %v227
  %v272 = vpack.c.b16 %v232, %v228
  %v273 = vpack.c.b16 %v233, %v229
  %v274 = vpack.c.b16 %v238, %v234
  %v275 = vpack.c.b16 %v239, %v235
  %v276 = vpack.c.b16 %v240, %v236
  %v277 = vpack.c.b16 %v241, %v237
  %v278 = vpack.c.b16 %v246, %v242
  %v279 = vpack.c.b16 %v247, %v243
  %v280 = vpack.c.b16 %v248, %v244
  %v281 = vpack.c.b16 %v249, %v245
  %314 = vmatprep.subr.bf16.mxu0 %v251
  %315 = vmatpush1.bf16.msra.mxu0 %v250
  %316 = vmatprep.subr.bf16.mxu0 %v255
  %317 = vmatpush1.bf16.msra.mxu0 %v254
  %318 = vmatprep.subr.bf16.mxu0 %v259
  %319 = vmatpush1.bf16.msra.mxu0 %v258
  %320 = vmatprep.subr.bf16.mxu0 %v263
  %321 = vmatpush1.bf16.msra.mxu0 %v262
  %322 = vmatprep.subr.bf16.mxu0 %v267
  %323 = vmatpush1.bf16.msra.mxu0 %v266
  %324 = vmatprep.subr.bf16.mxu0 %v271
  %325 = vmatpush1.bf16.msra.mxu0 %v270
  %326 = vmatprep.subr.bf16.mxu0 %v275
  %327 = vmatpush1.bf16.msra.mxu0 %v274
  %328 = vmatprep.subr.bf16.mxu0 %v279
  %329 = vmatpush1.bf16.msra.mxu0 %v278
  %330 = vmatprep.subr.bf16.mxu0 0
  %331 = vmatpush1.bf16.msra.mxu0 0
  %332 = vmatprep.subr.bf16.mxu0 0
  %333 = vmatpush1.bf16.msra.mxu0 0
  %334 = vmatprep.subr.bf16.mxu0 0
  %335 = vmatpush1.bf16.msra.mxu0 0
  %336 = vmatprep.subr.bf16.mxu0 0
  %337 = vmatpush1.bf16.msra.mxu0 0
  %338 = vmatprep.subr.bf16.mxu0 0
  %339 = vmatpush1.bf16.msra.mxu0 0
  %340 = vmatprep.subr.bf16.mxu0 0
  %341 = vmatpush1.bf16.msra.mxu0 0
  %342 = vmatprep.subr.bf16.mxu0 0
  %343 = vmatpush1.bf16.msra.mxu0 0
  %344 = vmatprep.subr.bf16.mxu0 0
  %345 = vmatpush1.bf16.msra.mxu0 0
  %346 = vmatprep.mubr.bf16.mxu0 0
  %347 = vmatmul.mubr.bf16.gmra.mrb[0].mxu0 %v98
  %v348 = vpop.f32.mrb[0].mxu0
  %v349 = vadd.f32 %v137, %v348
  %v350 = vpop.f32.mrb[0].mxu0
  %v351 = vadd.f32 %v141, %v350
  %v352 = vpop.f32.mrb[0].mxu0
  %v353 = vadd.f32 %v137, %v352
  %v354 = vpop.f32.mrb[0].mxu0
  %v355 = vadd.f32 %v141, %v354
  %356 = vmatprep.mubr.bf16.mxu0 0
  %357 = vmatmul.mubr.bf16.gmra.mrb[0].mxu0 %v99
  %v358 = vpop.f32.mrb[0].mxu0
  %v359 = vadd.f32 %v137, %v358
  %v360 = vpop.f32.mrb[0].mxu0
  %v361 = vadd.f32 %v141, %v360
  %v362 = vpop.f32.mrb[0].mxu0
  %v363 = vadd.f32 %v137, %v362
  %v364 = vpop.f32.mrb[0].mxu0
  %v365 = vadd.f32 %v141, %v364
  %366 = vdwg.mxu0
  %367 = vmatprep.subr.bf16.mxu0 %v253
  %368 = vmatpush1.bf16.msra.mxu0 %v252
  %369 = vmatprep.subr.bf16.mxu0 %v257
  %370 = vmatpush1.bf16.msra.mxu0 %v256
  %371 = vmatprep.subr.bf16.mxu0 %v261
  %372 = vmatpush1.bf16.msra.mxu0 %v260
  %373 = vmatprep.subr.bf16.mxu0 %v265
  %374 = vmatpush1.bf16.msra.mxu0 %v264
  %375 = vmatprep.subr.bf16.mxu0 %v269
  %376 = vmatpush1.bf16.msra.mxu0 %v268
  %377 = vmatprep.subr.bf16.mxu0 %v273
  %378 = vmatpush1.bf16.msra.mxu0 %v272
  %379 = vmatprep.subr.bf16.mxu0 %v277
  %380 = vmatpush1.bf16.msra.mxu0 %v276
  %381 = vmatprep.subr.bf16.mxu0 %v281
  %382 = vmatpush1.bf16.msra.mxu0 %v280
  %383 = vmatprep.subr.bf16.mxu0 0
  %384 = vmatpush1.bf16.msra.mxu0 0
  %385 = vmatprep.subr.bf16.mxu0 0
  %386 = vmatpush1.bf16.msra.mxu0 0
  %387 = vmatprep.subr.bf16.mxu0 0
  %388 = vmatpush1.bf16.msra.mxu0 0
  %389 = vmatprep.subr.bf16.mxu0 0
  %390 = vmatpush1.bf16.msra.mxu0 0
  %391 = vmatprep.subr.bf16.mxu0 0
  %392 = vmatpush1.bf16.msra.mxu0 0
  %393 = vmatprep.subr.bf16.mxu0 0
  %394 = vmatpush1.bf16.msra.mxu0 0
  %395 = vmatprep.subr.bf16.mxu0 0
  %396 = vmatpush1.bf16.msra.mxu0 0
  %397 = vmatprep.subr.bf16.mxu0 0
  %398 = vmatpush1.bf16.msra.mxu0 0
  %399 = vmatprep.mubr.bf16.mxu0 0
  %400 = vmatmul.mubr.bf16.gmra.mrb[0].mxu0 %v98
  %v401 = vpop.f32.mrb[0].mxu0
  %v402 = vadd.f32 %v145, %v401
  %v403 = vpop.f32.mrb[0].mxu0
  %v404 = vadd.f32 %v149, %v403
  %v405 = vpop.f32.mrb[0].mxu0
  %v406 = vadd.f32 %v145, %v405
  %v407 = vpop.f32.mrb[0].mxu0
  %v408 = vadd.f32 %v149, %v407
  %409 = vmatprep.mubr.bf16.mxu0 0
  %410 = vmatmul.mubr.bf16.gmra.mrb[0].mxu0 %v99
  %v411 = vpop.f32.mrb[0].mxu0
  %v412 = vadd.f32 %v145, %v411
  %v413 = vpop.f32.mrb[0].mxu0
  %v414 = vadd.f32 %v149, %v413
  %v415 = vpop.f32.mrb[0].mxu0
  %v416 = vadd.f32 %v145, %v415
  %v417 = vpop.f32.mrb[0].mxu0
  %v418 = vadd.f32 %v149, %v417
  %419 = vdwg.mxu0
  %v420 = vmax.f32 %v349, 0.0
  %v421 = vmax.f32 %v351, 0.0
  %v422 = vmax.f32 %v402, 0.0
  %v423 = vmax.f32 %v404, 0.0
  %v424 = vmax.f32 %v353, 0.0
  %v425 = vmax.f32 %v355, 0.0
  %v426 = vmax.f32 %v406, 0.0
  %v427 = vmax.f32 %v408, 0.0
  %v428 = vmax.f32 %v359, 0.0
  %v429 = vmax.f32 %v361, 0.0
  %v430 = vmax.f32 %v412, 0.0
  %v431 = vmax.f32 %v414, 0.0
  %v432 = vmax.f32 %v363, 0.0
  %v433 = vmax.f32 %v365, 0.0
  %v434 = vmax.f32 %v416, 0.0
  %v435 = vmax.f32 %v418, 0.0
  %v436 = vpack.c.bf16 %v424, %v420
  %v437 = vpack.c.bf16 %v425, %v421
  %v438 = vpack.c.bf16 %v426, %v422
  %v439 = vpack.c.bf16 %v427, %v423
  %v440 = vpack.c.bf16 %v432, %v428
  %v441 = vpack.c.bf16 %v433, %v429
  %v442 = vpack.c.bf16 %v434, %v430
  %v443 = vpack.c.bf16 %v435, %v431
  %v444 = vld [vmem:[%s5] sm:$0xf]
  %v445 = vld [vmem:[%s5 + $0x4] sm:$0xf]
  %v446 = vld [vmem:[%s5 + $0x8] sm:$0xf]
  %v447 = vld [vmem:[%s5 + $0xc] sm:$0xf]
  %v448 = vld [vmem:[%s5 + $0x10] sm:$0xf]
  %v449 = vld [vmem:[%s5 + $0x14] sm:$0xf]
  %v450 = vld [vmem:[%s5 + $0x18] sm:$0xf]
  %v451 = vld [vmem:[%s5 + $0x1c] sm:$0xf]
  %v452 = vld [vmem:[%s5 + $0x20] sm:$0xf]
  %v453 = vld [vmem:[%s5 + $0x24] sm:$0xf]
  %v454 = vld [vmem:[%s5 + $0x28] sm:$0xf]
  %v455 = vld [vmem:[%s5 + $0x2c] sm:$0xf]
  %v456 = vld [vmem:[%s5 + $0x30] sm:$0xf]
  %v457 = vld [vmem:[%s5 + $0x34] sm:$0xf]
  %v458 = vld [vmem:[%s5 + $0x38] sm:$0xf]
  %v459 = vld [vmem:[%s5 + $0x3c] sm:$0xf]
  %v460 = vld [vmem:[%s5 + $0x40] sm:$0xf]
  %v461 = vld [vmem:[%s5 + $0x44] sm:$0xf]
  %v462 = vld [vmem:[%s5 + $0x48] sm:$0xf]
  %v463 = vld [vmem:[%s5 + $0x4c] sm:$0xf]
  %v464 = vld [vmem:[%s5 + $0x50] sm:$0xf]
  %v465 = vld [vmem:[%s5 + $0x54] sm:$0xf]
  %v466 = vld [vmem:[%s5 + $0x58] sm:$0xf]
  %v467 = vld [vmem:[%s5 + $0x5c] sm:$0xf]
  %v468 = vld [vmem:[%s5 + $0x60] sm:$0xf]
  %v469 = vld [vmem:[%s5 + $0x64] sm:$0xf]
  %v470 = vld [vmem:[%s5 + $0x68] sm:$0xf]
  %v471 = vld [vmem:[%s5 + $0x6c] sm:$0xf]
  %v472 = vld [vmem:[%s5 + $0x70] sm:$0xf]
  %v473 = vld [vmem:[%s5 + $0x74] sm:$0xf]
  %v474 = vld [vmem:[%s5 + $0x78] sm:$0xf]
  %v475 = vld [vmem:[%s5 + $0x7c] sm:$0xf]
  %v476 = vld [vmem:[%s5 + $0x80] sm:$0xf]
  %v477 = vld [vmem:[%s5 + $0x84] sm:$0xf]
  %v478 = vld [vmem:[%s5 + $0x88] sm:$0xf]
  %v479 = vld [vmem:[%s5 + $0x8c] sm:$0xf]
  %v480 = vld [vmem:[%s5 + $0x90] sm:$0xf]
  %v481 = vld [vmem:[%s5 + $0x94] sm:$0xf]
  %v482 = vld [vmem:[%s5 + $0x98] sm:$0xf]
  %v483 = vld [vmem:[%s5 + $0x9c] sm:$0xf]
  %v484 = vld [vmem:[%s5 + $0xa0] sm:$0xf]
  %v485 = vld [vmem:[%s5 + $0xa4] sm:$0xf]
  %v486 = vld [vmem:[%s5 + $0xa8] sm:$0xf]
  %v487 = vld [vmem:[%s5 + $0xac] sm:$0xf]
  %v488 = vld [vmem:[%s5 + $0xb0] sm:$0xf]
  %v489 = vld [vmem:[%s5 + $0xb4] sm:$0xf]
  %v490 = vld [vmem:[%s5 + $0xb8] sm:$0xf]
  %v491 = vld [vmem:[%s5 + $0xbc] sm:$0xf]
  %v492 = vld [vmem:[%s5 + $0xc0] sm:$0xf]
  %v493 = vld [vmem:[%s5 + $0xc4] sm:$0xf]
  %v494 = vld [vmem:[%s5 + $0xc8] sm:$0xf]
  %v495 = vld [vmem:[%s5 + $0xcc] sm:$0xf]
  %v496 = vld [vmem:[%s5 + $0xd0] sm:$0xf]
  %v497 = vld [vmem:[%s5 + $0xd4] sm:$0xf]
  %v498 = vld [vmem:[%s5 + $0xd8] sm:$0xf]
  %v499 = vld [vmem:[%s5 + $0xdc] sm:$0xf]
  %v500 = vld [vmem:[%s5 + $0xe0] sm:$0xf]
  %v501 = vld [vmem:[%s5 + $0xe4] sm:$0xf]
  %v502 = vld [vmem:[%s5 + $0xe8] sm:$0xf]
  %v503 = vld [vmem:[%s5 + $0xec] sm:$0xf]
  %v504 = vld [vmem:[%s5 + $0xf0] sm:$0xf]
  %v505 = vld [vmem:[%s5 + $0xf4] sm:$0xf]
  %v506 = vld [vmem:[%s5 + $0xf8] sm:$0xf]
  %v507 = vld [vmem:[%s5 + $0xfc] sm:$0xf]
  %v508 = vld [vmem:[%s6] sm:$0x1]
  %v510 = vlaneseq
  %v511 = vshrl.u32 %v510, 7
  %v512 = vsub.s32 0, %v511
  %v513 = vrot.slane %v508, %v512
  %v579 = vunpack.c.l.b16 %v444
  %v580 = vunpack.c.l.b16 %v445
  %v581 = vunpack.c.l.b16 %v446
  %v582 = vunpack.c.l.b16 %v447
  %v583 = vunpack.c.l.b16 %v448
  %v584 = vunpack.c.l.b16 %v449
  %v585 = vunpack.c.l.b16 %v450
  %v586 = vunpack.c.l.b16 %v451
  %v587 = vunpack.c.l.b16 %v452
  %v588 = vunpack.c.l.b16 %v453
  %v589 = vunpack.c.l.b16 %v454
  %v590 = vunpack.c.l.b16 %v455
  %v591 = vunpack.c.l.b16 %v456
  %v592 = vunpack.c.l.b16 %v457
  %v593 = vunpack.c.l.b16 %v458
  %v594 = vunpack.c.l.b16 %v459
  %v595 = vunpack.c.l.b16 %v460
  %v596 = vunpack.c.l.b16 %v461
  %v597 = vunpack.c.l.b16 %v462
  %v598 = vunpack.c.l.b16 %v463
  %v599 = vunpack.c.l.b16 %v464
  %v600 = vunpack.c.l.b16 %v465
  %v601 = vunpack.c.l.b16 %v466
  %v602 = vunpack.c.l.b16 %v467
  %v603 = vunpack.c.l.b16 %v468
  %v604 = vunpack.c.l.b16 %v469
  %v605 = vunpack.c.l.b16 %v470
  %v606 = vunpack.c.l.b16 %v471
  %v607 = vunpack.c.l.b16 %v472
  %v608 = vunpack.c.l.b16 %v473
  %v609 = vunpack.c.l.b16 %v474
  %v610 = vunpack.c.l.b16 %v475
  %v611 = vunpack.c.l.b16 %v476
  %v612 = vunpack.c.l.b16 %v477
  %v613 = vunpack.c.l.b16 %v478
  %v614 = vunpack.c.l.b16 %v479
  %v615 = vunpack.c.l.b16 %v480
  %v616 = vunpack.c.l.b16 %v481
  %v617 = vunpack.c.l.b16 %v482
  %v618 = vunpack.c.l.b16 %v483
  %v619 = vunpack.c.l.b16 %v484
  %v620 = vunpack.c.l.b16 %v485
  %v621 = vunpack.c.l.b16 %v486
  %v622 = vunpack.c.l.b16 %v487
  %v623 = vunpack.c.l.b16 %v488
  %v624 = vunpack.c.l.b16 %v489
  %v625 = vunpack.c.l.b16 %v490
  %v626 = vunpack.c.l.b16 %v491
  %v627 = vunpack.c.l.b16 %v492
  %v628 = vunpack.c.l.b16 %v493
  %v629 = vunpack.c.l.b16 %v494
  %v630 = vunpack.c.l.b16 %v495
  %v631 = vunpack.c.l.b16 %v496
  %v632 = vunpack.c.l.b16 %v497
  %v633 = vunpack.c.l.b16 %v498
  %v634 = vunpack.c.l.b16 %v499
  %v635 = vunpack.c.l.b16 %v500
  %v636 = vunpack.c.l.b16 %v501
  %v637 = vunpack.c.l.b16 %v502
  %v638 = vunpack.c.l.b16 %v503
  %v639 = vunpack.c.l.b16 %v504
  %v640 = vunpack.c.l.b16 %v505
  %v641 = vunpack.c.l.b16 %v506
  %v642 = vunpack.c.l.b16 %v507
  %v643 = vpack.c.b16 %v580, %v579
  %v644 = vpack.c.b16 %v582, %v581
  %v645 = vpack.c.b16 %v584, %v583
  %v646 = vpack.c.b16 %v586, %v585
  %v647 = vpack.c.b16 %v588, %v587
  %v648 = vpack.c.b16 %v590, %v589
  %v649 = vpack.c.b16 %v592, %v591
  %v650 = vpack.c.b16 %v594, %v593
  %v651 = vpack.c.b16 %v596, %v595
  %v652 = vpack.c.b16 %v598, %v597
  %v653 = vpack.c.b16 %v600, %v599
  %v654 = vpack.c.b16 %v602, %v601
  %v655 = vpack.c.b16 %v604, %v603
  %v656 = vpack.c.b16 %v606, %v605
  %v657 = vpack.c.b16 %v608, %v607
  %v658 = vpack.c.b16 %v610, %v609
  %v659 = vpack.c.b16 %v612, %v611
  %v660 = vpack.c.b16 %v614, %v613
  %v661 = vpack.c.b16 %v616, %v615
  %v662 = vpack.c.b16 %v618, %v617
  %v663 = vpack.c.b16 %v620, %v619
  %v664 = vpack.c.b16 %v622, %v621
  %v665 = vpack.c.b16 %v624, %v623
  %v666 = vpack.c.b16 %v626, %v625
  %v667 = vpack.c.b16 %v628, %v627
  %v668 = vpack.c.b16 %v630, %v629
  %v669 = vpack.c.b16 %v632, %v631
  %v670 = vpack.c.b16 %v634, %v633
  %v671 = vpack.c.b16 %v636, %v635
  %v672 = vpack.c.b16 %v638, %v637
  %v673 = vpack.c.b16 %v640, %v639
  %v674 = vpack.c.b16 %v642, %v641
  %707 = vmatprep.subr.bf16.mxu0 0
  %708 = vmatpush1.bf16.msra.mxu0 %v643
  %709 = vmatprep.subr.bf16.mxu0 0
  %710 = vmatpush1.bf16.msra.mxu0 %v644
  %711 = vmatprep.subr.bf16.mxu0 0
  %712 = vmatpush1.bf16.msra.mxu0 %v645
  %713 = vmatprep.subr.bf16.mxu0 0
  %714 = vmatpush1.bf16.msra.mxu0 %v646
  %715 = vmatprep.subr.bf16.mxu0 0
  %716 = vmatpush1.bf16.msra.mxu0 %v647
  %717 = vmatprep.subr.bf16.mxu0 0
  %718 = vmatpush1.bf16.msra.mxu0 %v648
  %719 = vmatprep.subr.bf16.mxu0 0
  %720 = vmatpush1.bf16.msra.mxu0 %v649
  %721 = vmatprep.subr.bf16.mxu0 0
  %722 = vmatpush1.bf16.msra.mxu0 %v650
  %723 = vmatprep.subr.bf16.mxu0 0
  %724 = vmatpush1.bf16.msra.mxu0 %v651
  %725 = vmatprep.subr.bf16.mxu0 0
  %726 = vmatpush1.bf16.msra.mxu0 %v652
  %727 = vmatprep.subr.bf16.mxu0 0
  %728 = vmatpush1.bf16.msra.mxu0 %v653
  %729 = vmatprep.subr.bf16.mxu0 0
  %730 = vmatpush1.bf16.msra.mxu0 %v654
  %731 = vmatprep.subr.bf16.mxu0 0
  %732 = vmatpush1.bf16.msra.mxu0 %v655
  %733 = vmatprep.subr.bf16.mxu0 0
  %734 = vmatpush1.bf16.msra.mxu0 %v656
  %735 = vmatprep.subr.bf16.mxu0 0
  %736 = vmatpush1.bf16.msra.mxu0 %v657
  %737 = vmatprep.subr.bf16.mxu0 0
  %738 = vmatpush1.bf16.msra.mxu0 %v658
  %739 = vmatprep.mubr.bf16.mxu0 %v437
  %740 = vmatmul.mubr.bf16.gmra.mrb[0].mxu0 %v436
  %v741 = vpop.f32.mrb[0].mxu0
  %v742 = vadd.f32 %v513, %v741
  %v743 = vpop.f32.mrb[0].mxu0
  %v744 = vpop.f32.mrb[0].mxu0
  %v745 = vadd.f32 %v513, %v744
  %v746 = vpop.f32.mrb[0].mxu0
  %747 = vmatprep.mubr.bf16.mxu0 %v441
  %748 = vmatmul.mubr.bf16.gmra.mrb[0].mxu0 %v440
  %v749 = vpop.f32.mrb[0].mxu0
  %v750 = vadd.f32 %v513, %v749
  %v751 = vpop.f32.mrb[0].mxu0
  %v752 = vpop.f32.mrb[0].mxu0
  %v753 = vadd.f32 %v513, %v752
  %v754 = vpop.f32.mrb[0].mxu0
  %755 = vdwg.mxu0
  %756 = vmatprep.subr.bf16.mxu0 0
  %757 = vmatpush1.bf16.msra.mxu0 %v659
  %758 = vmatprep.subr.bf16.mxu0 0
  %759 = vmatpush1.bf16.msra.mxu0 %v660
  %760 = vmatprep.subr.bf16.mxu0 0
  %761 = vmatpush1.bf16.msra.mxu0 %v661
  %762 = vmatprep.subr.bf16.mxu0 0
  %763 = vmatpush1.bf16.msra.mxu0 %v662
  %764 = vmatprep.subr.bf16.mxu0 0
  %765 = vmatpush1.bf16.msra.mxu0 %v663
  %766 = vmatprep.subr.bf16.mxu0 0
  %767 = vmatpush1.bf16.msra.mxu0 %v664
  %768 = vmatprep.subr.bf16.mxu0 0
  %769 = vmatpush1.bf16.msra.mxu0 %v665
  %770 = vmatprep.subr.bf16.mxu0 0
  %771 = vmatpush1.bf16.msra.mxu0 %v666
  %772 = vmatprep.subr.bf16.mxu0 0
  %773 = vmatpush1.bf16.msra.mxu0 %v667
  %774 = vmatprep.subr.bf16.mxu0 0
  %775 = vmatpush1.bf16.msra.mxu0 %v668
  %776 = vmatprep.subr.bf16.mxu0 0
  %777 = vmatpush1.bf16.msra.mxu0 %v669
  %778 = vmatprep.subr.bf16.mxu0 0
  %779 = vmatpush1.bf16.msra.mxu0 %v670
  %780 = vmatprep.subr.bf16.mxu0 0
  %781 = vmatpush1.bf16.msra.mxu0 %v671
  %782 = vmatprep.subr.bf16.mxu0 0
  %783 = vmatpush1.bf16.msra.mxu0 %v672
  %784 = vmatprep.subr.bf16.mxu0 0
  %785 = vmatpush1.bf16.msra.mxu0 %v673
  %786 = vmatprep.subr.bf16.mxu0 0
  %787 = vmatpush1.bf16.msra.mxu0 %v674
  %788 = vmatprep.mubr.bf16.mxu0 %v439
  %789 = vmatmul.mubr.bf16.gmra.mrb[0].mxu0 %v438
  %v790 = vpop.f32.mrb[0].mxu0
  %v791 = vadd.f32 %v742, %v790
  %v792 = vpop.f32.mrb[0].mxu0
  %v793 = vpop.f32.mrb[0].mxu0
  %v794 = vadd.f32 %v745, %v793
  %v795 = vpop.f32.mrb[0].mxu0
  %796 = vmatprep.mubr.bf16.mxu0 %v443
  %797 = vmatmul.mubr.bf16.gmra.mrb[0].mxu0 %v442
  %v798 = vpop.f32.mrb[0].mxu0
  %v799 = vadd.f32 %v750, %v798
  %v800 = vpop.f32.mrb[0].mxu0
  %v801 = vpop.f32.mrb[0].mxu0
  %v802 = vadd.f32 %v753, %v801
  %v803 = vpop.f32.mrb[0].mxu0
  %804 = vdwg.mxu0
  %v805 = vadd.f32 %v791, %v27
  %v806 = vadd.f32 %v794, %v28
  %v807 = vadd.f32 %v799, %v29
  %v808 = vadd.f32 %v802, %v30
  %809 = vst [vmem:[%s7] sm:$0xff] %v805
  %810 = vst [vmem:[%s7 + $0x8] sm:$0xff] %v806
  %811 = vst [vmem:[%s7 + $0x10] sm:$0xff] %v807
  %812 = vst [vmem:[%s7 + $0x18] sm:$0xff] %v808
  // Predicated region
  $region30: #{positionwise_ffn.1} parent=0 // pred_check
    _
  $region31: #{positionwise_ffn.1} parent=0 // pred_check_branch
    %814 = sbr.rel (0) target = $region33
  $region32: #{positionwise_ffn.1} parent=0 // pred_region
    _
  $region33: #{positionwise_ffn.1} parent=0 // pred_fallthru
    _
  // Predicated region
  $region34: #{positionwise_ffn.1} parent=0 // pred_check
    _
  $region35: #{positionwise_ffn.1} parent=0 // pred_check_branch
    %816 = sbr.rel (0) target = $region37
  $region36: #{positionwise_ffn.1} parent=0 // pred_region
    _
  $region37: #{positionwise_ffn.1} parent=0 // pred_fallthru
    _

// kernel: positionwise_ffn.1
$region0: #{positionwise_ffn.1}
  #allocation0 [shape = 'u32[]', space=smem, size = 0x4, offset = 0x4, fixed_abs, tag = 'smem constant byte address 0x4 - core index']
  #allocation1 [shape = 'u32[144,128]{1,0:T(1,128)}', space=vmem, size = 0x12000, scoped, tag = 'internal scratch']
  %s0 = inlined_call_operand.vmem [shape: f32[32,128], index: 0, kind: input, shape index: {}]
  %s1 = inlined_call_operand.vmem [shape: f32[1,128], index: 1, kind: input, shape index: {}]
  %s2 = inlined_call_operand.vmem [shape: f32[1,128], index: 2, kind: input, shape index: {}]
  %s3 = inlined_call_operand.vmem [shape: bf16[128,512], index: 3, kind: input, shape index: {}]
  %s4 = inlined_call_operand.vmem [shape: f32[1,512], index: 4, kind: input, shape index: {}]
  %s5 = inlined_call_operand.vmem [shape: bf16[512,128], index: 5, kind: input, shape index: {}]
  %s6 = inlined_call_operand.vmem [shape: f32[1,128], index: 6, kind: input, shape index: {}]
  %s7 = inlined_call_operand.vmem [shape: f32[32,128], index: 7, kind: output, shape index: {}]
  %s8 = sld [smem:[#allocation0]]
  $region38: #{positionwise_ffn.1} parent=0
    _
  %s10 = ssub.s32 1, %s8
  %s11 = scalar_select 0, %s10, %s8
  // Predicated region
  $region2: #{positionwise_ffn.1} parent=0 // pred_check
    _
  $region3: #{positionwise_ffn.1} parent=0 // pred_check_branch
    %13 = sbr.rel (0) target = $region5
  $region4: #{positionwise_ffn.1} parent=0 // pred_region
    _
  $region5: #{positionwise_ffn.1} parent=0 // pred_fallthru
    _
  // Predicated region
  $region6: #{positionwise_ffn.1} parent=0 // pred_check
    _
  $region7: #{positionwise_ffn.1} parent=0 // pred_check_branch
    %15 = sbr.rel (0) target = $region9
  $region8: #{positionwise_ffn.1} parent=0 // pred_region
    _
  $region9: #{positionwise_ffn.1} parent=0 // pred_fallthru
    _
  // Predicated region
  $region10: #{positionwise_ffn.1} parent=0 // pred_check
    _
  $region11: #{positionwise_ffn.1} parent=0 // pred_check_branch
    %17 = sbr.rel (0) target = $region13
  $region12: #{positionwise_ffn.1} parent=0 // pred_region
    _
  $region13: #{positionwise_ffn.1} parent=0 // pred_fallthru
    _
  // Predicated region
  $region14: #{positionwise_ffn.1} parent=0 // pred_check
    _
  $region15: #{positionwise_ffn.1} parent=0 // pred_check_branch
    %19 = sbr.rel (0) target = $region17
  $region16: #{positionwise_ffn.1} parent=0 // pred_region
    _
  $region17: #{positionwise_ffn.1} parent=0 // pred_fallthru
    _
  // Predicated region
  $region18: #{positionwise_ffn.1} parent=0 // pred_check
    _
  $region19: #{positionwise_ffn.1} parent=0 // pred_check_branch
    %21 = sbr.rel (0) target = $region21
  $region20: #{positionwise_ffn.1} parent=0 // pred_region
    _
  $region21: #{positionwise_ffn.1} parent=0 // pred_fallthru
    _
  // Predicated region
  $region22: #{positionwise_ffn.1} parent=0 // pred_check
    _
  $region23: #{positionwise_ffn.1} parent=0 // pred_check_branch
    %23 = sbr.rel (0) target = $region25
  $region24: #{positionwise_ffn.1} parent=0 // pred_region
    _
  $region25: #{positionwise_ffn.1} parent=0 // pred_fallthru
    _
  // Predicated region
  $region26: #{positionwise_ffn.1} parent=0 // pred_check
    _
  $region27: #{positionwise_ffn.1} parent=0 // pred_check_branch
    %25 = sbr.rel (0) target = $region29
  $region28: #{positionwise_ffn.1} parent=0 // pred_region
    _
  $region29: #{positionwise_ffn.1} parent=0 // pred_fallthru
    _
  %v27 = vld [vmem:[%s0] sm:$0xff]
  %v28 = vld [vmem:[%s0 + $0x8] sm:$0xff]
  %v29 = vld [vmem:[%s0 + $0x10] sm:$0xff]
  %v30 = vld [vmem:[%s0 + $0x18] sm:$0xff]
  %31 = vadd.xlane.f32.xlu0 %v27
  %v32 = vpop.xlane.xlu0 %31
  %33 = vadd.xlane.f32.xlu0 %v28
  %v34 = vpop.xlane.xlu0 %33
  %35 = vadd.xlane.f32.xlu0 %v29
  %v36 = vpop.xlane.xlu0 %35
  %37 = vadd.xlane.f32.xlu0 %v30
  %v38 = vpop.xlane.xlu0 %37
  %v39 = vrcp.pop 128.0
  %v40 = vmul.f32 %v32, %v39
  %v41 = vmul.f32 %v34, %v39
  %v42 = vmul.f32 %v36, %v39
  %v43 = vmul.f32 %v38, %v39
  %v44 = vsub.f32 %v27, %v40
  %v45 = vsub.f32 %v28, %v41
  %v46 = vsub.f32 %v29, %v42
  %v47 = vsub.f32 %v30, %v43
  %v48 = vmul.f32 %v44, %v44
  %v49 = vmul.f32 %v45, %v45
  %v50 = vmul.f32 %v46, %v46
  %v51 = vmul.f32 %v47, %v47
  %52 = vadd.xlane.f32.xlu0 %v48
  %v53 = vpop.xlane.xlu0 %52
  %54 = vadd.xlane.f32.xlu0 %v49
  %v55 = vpop.xlane.xlu0 %54
  %56 = vadd.xlane.f32.xlu0 %v50
  %v57 = vpop.xlane.xlu0 %56
  %58 = vadd.xlane.f32.xlu0 %v51
  %v59 = vpop.xlane.xlu0 %58
  %v60 = vmul.f32 %v53, %v39
  %v61 = vmul.f32 %v55, %v39
  %v62 = vmul.f32 %v57, %v39
  %v63 = vmul.f32 %v59, %v39
  %v64 = vadd.f32 %v60, 1e-06
  %v65 = vadd.f32 %v61, 1e-06
  %v66 = vadd.f32 %v62, 1e-06
  %v67 = vadd.f32 %v63, 1e-06
  %v68 = vrsqrt.pop %v64
  %v69 = vrsqrt.pop %v65
  %v70 = vrsqrt.pop %v66
  %v71 = vrsqrt.pop %v67
  %v72 = vmul.f32 %v44, %v68
  %v73 = vmul.f32 %v45, %v69
  %v74 = vmul.f32 %v46, %v70
  %v75 = vmul.f32 %v47, %v71
  %v76 = vld [vmem:[%s1] sm:$0x1]
  %v78 = vlaneseq
  %v79 = vshrl.u32 %v78, 7
  %v80 = vsub.s32 0, %v79
  %v81 = vrot.slane %v76, %v80
  %v83 = vmul.f32 %v72, %v81
  %v84 = vmul.f32 %v73, %v81
  %v85 = vmul.f32 %v74, %v81
  %v86 = vmul.f32 %v75, %v81
  %v87 = vld [vmem:[%s2] sm:$0x1]
  %v89 = vlaneseq
  %v90 = vshrl.u32 %v89, 7
  %v91 = vsub.s32 0, %v90
  %v92 = vrot.slane %v87, %v91
  %v94 = vadd.f32 %v83, %v92
  %v95 = vadd.f32 %v84, %v92
  %v96 = vadd.f32 %v85, %v92
  %v97 = vadd.f32 %v86, %v92
  %v98 = vpack.c.bf16 %v95, %v94
  %v99 = vpack.c.bf16 %v97, %v96
  %v100 = vld [vmem:[%s3] sm:$0xff]
  %v101 = vld [vmem:[%s3 + $0x8] sm:$0xff]
  %v102 = vld [vmem:[%s3 + $0x10] sm:$0xff]
  %v103 = vld [vmem:[%s3 + $0x18] sm:$0xff]
  %v104 = vld [vmem:[%s3 + $0x20] sm:$0xff]
  %v105 = vld [vmem:[%s3 + $0x28] sm:$0xff]
  %v106 = vld [vmem:[%s3 + $0x30] sm:$0xff]
  %v107 = vld [vmem:[%s3 + $0x38] sm:$0xff]
  %v108 = vld [vmem:[%s3 + $0x40] sm:$0xff]
  %v109 = vld [vmem:[%s3 + $0x48] sm:$0xff]
  %v110 = vld [vmem:[%s3 + $0x50] sm:$0xff]
  %v111 = vld [vmem:[%s3 + $0x58] sm:$0xff]
  %v112 = vld [vmem:[%s3 + $0x60] sm:$0xff]
  %v113 = vld [vmem:[%s3 + $0x68] sm:$0xff]
  %v114 = vld [vmem:[%s3 + $0x70] sm:$0xff]
  %v115 = vld [vmem:[%s3 + $0x78] sm:$0xff]
  %v116 = vld [vmem:[%s3 + $0x80] sm:$0xff]
  %v117 = vld [vmem:[%s3 + $0x88] sm:$0xff]
  %v118 = vld [vmem:[%s3 + $0x90] sm:$0xff]
  %v119 = vld [vmem:[%s3 + $0x98] sm:$0xff]
  %v120 = vld [vmem:[%s3 + $0xa0] sm:$0xff]
  %v121 = vld [vmem:[%s3 + $0xa8] sm:$0xff]
  %v122 = vld [vmem:[%s3 + $0xb0] sm:$0xff]
  %v123 = vld [vmem:[%s3 + $0xb8] sm:$0xff]
  %v124 = vld [vmem:[%s3 + $0xc0] sm:$0xff]
  %v125 = vld [vmem:[%s3 + $0xc8] sm:$0xff]
  %v126 = vld [vmem:[%s3 + $0xd0] sm:$0xff]
  %v127 = vld [vmem:[%s3 + $0xd8] sm:$0xff]
  %v128 = vld [vmem:[%s3 + $0xe0] sm:$0xff]
  %v129 = vld [vmem:[%s3 + $0xe8] sm:$0xff]
  %v130 = vld [vmem:[%s3 + $0xf0] sm:$0xff]
  %v131 = vld [vmem:[%s3 + $0xf8] sm:$0xff]
  %v132 = vld [vmem:[%s4] sm:$0xf]
  %v134 = vlaneseq
  %v135 = vshrl.u32 %v134, 7
  %v136 = vsub.s32 0, %v135
  %v137 = vrot.slane %v132, %v136
  %v138 = vlaneseq
  %v139 = vshrl.u32 %v138, 7
  %v140 = vsub.s32 1, %v139
  %v141 = vrot.slane %v132, %v140
  %v142 = vlaneseq
  %v143 = vshrl.u32 %v142, 7
  %v144 = vsub.s32 2, %v143
  %v145 = vrot.slane %v132, %v144
  %v146 = vlaneseq
  %v147 = vshrl.u32 %v146, 7
  %v148 = vsub.s32 3, %v147
  %v149 = vrot.slane %v132, %v148
  %v186 = vunpack.c.l.b16 %v100
  %v187 = vunpack.c.h.b16 %v100
  %v188 = vunpack.c.l.b16 %v101
  %v189 = vunpack.c.h.b16 %v101
  %v190 = vunpack.c.l.b16 %v102
  %v191 = vunpack.c.h.b16 %v102
  %v192 = vunpack.c.l.b16 %v103
  %v193 = vunpack.c.h.b16 %v103
  %v194 = vunpack.c.l.b16 %v104
  %v195 = vunpack.c.h.b16 %v104
  %v196 = vunpack.c.l.b16 %v105
  %v197 = vunpack.c.h.b16 %v105
  %v198 = vunpack.c.l.b16 %v106
  %v199 = vunpack.c.h.b16 %v106
  %v200 = vunpack.c.l.b16 %v107
  %v201 = vunpack.c.h.b16 %v107
  %v202 = vunpack.c.l.b16 %v108
  %v203 = vunpack.c.h.b16 %v108
  %v204 = vunpack.c.l.b16 %v109
  %v205 = vunpack.c.h.b16 %v109
  %v206 = vunpack.c.l.b16 %v110
  %v207 = vunpack.c.h.b16 %v110
  %v208 = vunpack.c.l.b16 %v111
  %v209 = vunpack.c.h.b16 %v111
  %v210 = vunpack.c.l.b16 %v112
  %v211 = vunpack.c.h.b16 %v112
  %v212 = vunpack.c.l.b16 %v113
  %v213 = vunpack.c.h.b16 %v113
  %v214 = vunpack.c.l.b16 %v114
  %v215 = vunpack.c.h.b16 %v114
  %v216 = vunpack.c.l.b16 %v115
  %v217 = vunpack.c.h.b16 %v115
  %v218 = vunpack.c.l.b16 %v116
  %v219 = vunpack.c.h.b16 %v116
  %v220 = vunpack.c.l.b16 %v117
  %v221 = vunpack.c.h.b16 %v117
  %v222 = vunpack.c.l.b16 %v118
  %v223 = vunpack.c.h.b16 %v118
  %v224 = vunpack.c.l.b16 %v119
  %v225 = vunpack.c.h.b16 %v119
  %v226 = vunpack.c.l.b16 %v120
  %v227 = vunpack.c.h.b16 %v120
  %v228 = vunpack.c.l.b16 %v121
  %v229 = vunpack.c.h.b16 %v121
  %v230 = vunpack.c.l.b16 %v122
  %v231 = vunpack.c.h.b16 %v122
  %v232 = vunpack.c.l.b16 %v123
  %v233 = vunpack.c.h.b16 %v123
  %v234 = vunpack.c.l.b16 %v124
  %v235 = vunpack.c.h.b16 %v124
  %v236 = vunpack.c.l.b16 %v125
  %v237 = vunpack.c.h.b16 %v125
  %v238 = vunpack.c.l.b16 %v126
  %v239 = vunpack.c.h.b16 %v126
  %v240 = vunpack.c.l.b16 %v127
  %v241 = vunpack.c.h.b16 %v127
  %v242 = vunpack.c.l.b16 %v128
  %v243 = vunpack.c.h.b16 %v128
  %v244 = vunpack.c.l.b16 %v129
  %v245 = vunpack.c.h.b16 %v129
  %v246 = vunpack.c.l.b16 %v130
  %v247 = vunpack.c.h.b16 %v130
  %v248 = vunpack.c.l.b16 %v131
  %v249 = vunpack.c.h.b16 %v131
  %v250 = vpack.c.b16 %v190, %v186
  %v251 = vpack.c.b16 %v191, %v187
  %v252 = vpack.c.b16 %v192, %v188
  %v253 = vpack.c.b16 %v193, %v189
  %v254 = vpack.c.b16 %v198, %v194
  %v255 = vpack.c.b16 %v199, %v195
  %v256 = vpack.c.b16 %v200, %v196
  %v257 = vpack.c.b16 %v201, %v197
  %v258 = vpack.c.b16 %v206, %v202
  %v259 = vpack.c.b16 %v207, %v203
  %v260 = vpack.c.b16 %v208, %v204
  %v261 = vpack.c.b16 %v209, %v205
  %v262 = vpack.c.b16 %v214, %v210
  %v263 = vpack.c.b16 %v215, %v211
  %v264 = vpack.c.b16 %v216, %v212
  %v265 = vpack.c.b16 %v217, %v213
  %v266 = vpack.c.b16 %v222, %v218
  %v267 = vpack.c.b16 %v223, %v219
  %v268 = vpack.c.b16 %v224, %v220
  %v269 = vpack.c.b16 %v225, %v221
  %v270 = vpack.c.b16 %v230, %v226
  %v271 = vpack.c.b16 %v231, %v227
  %v272 = vpack.c.b16 %v232, %v228
  %v273 = vpack.c.b16 %v233, %v229
  %v274 = vpack.c.b16 %v238, %v234
  %v275 = vpack.c.b16 %v239, %v235
  %v276 = vpack.c.b16 %v240, %v236
  %v277 = vpack.c.b16 %v241, %v237
  %v278 = vpack.c.b16 %v246, %v242
  %v279 = vpack.c.b16 %v247, %v243
  %v280 = vpack.c.b16 %v248, %v244
  %v281 = vpack.c.b16 %v249, %v245
  %314 = vmatprep.subr.bf16.mxu0 %v251
  %315 = vmatpush1.bf16.msra.mxu0 %v250
  %316 = vmatprep.subr.bf16.mxu0 %v255
  %317 = vmatpush1.bf16.msra.mxu0 %v254
  %318 = vmatprep.subr.bf16.mxu0 %v259
  %319 = vmatpush1.bf16.msra.mxu0 %v258
  %320 = vmatprep.subr.bf16.mxu0 %v263
  %321 = vmatpush1.bf16.msra.mxu0 %v262
  %322 = vmatprep.subr.bf16.mxu0 %v267
  %323 = vmatpush1.bf16.msra.mxu0 %v266
  %324 = vmatprep.subr.bf16.mxu0 %v271
  %325 = vmatpush1.bf16.msra.mxu0 %v270
  %326 = vmatprep.subr.bf16.mxu0 %v275
  %327 = vmatpush1.bf16.msra.mxu0 %v274
  %328 = vmatprep.subr.bf16.mxu0 %v279
  %329 = vmatpush1.bf16.msra.mxu0 %v278
  %330 = vmatprep.subr.bf16.mxu0 0
  %331 = vmatpush1.bf16.msra.mxu0 0
  %332 = vmatprep.subr.bf16.mxu0 0
  %333 = vmatpush1.bf16.msra.mxu0 0
  %334 = vmatprep.subr.bf16.mxu0 0
  %335 = vmatpush1.bf16.msra.mxu0 0
  %336 = vmatprep.subr.bf16.mxu0 0
  %337 = vmatpush1.bf16.msra.mxu0 0
  %338 = vmatprep.subr.bf16.mxu0 0
  %339 = vmatpush1.bf16.msra.mxu0 0
  %340 = vmatprep.subr.bf16.mxu0 0
  %341 = vmatpush1.bf16.msra.mxu0 0
  %342 = vmatprep.subr.bf16.mxu0 0
  %343 = vmatpush1.bf16.msra.mxu0 0
  %344 = vmatprep.subr.bf16.mxu0 0
  %345 = vmatpush1.bf16.msra.mxu0 0
  %346 = vmatprep.mubr.bf16.mxu0 0
  %347 = vmatmul.mubr.bf16.gmra.mrb[0].mxu0 %v98
  %v348 = vpop.f32.mrb[0].mxu0
  %v349 = vadd.f32 %v137, %v348
  %v350 = vpop.f32.mrb[0].mxu0
  %v351 = vadd.f32 %v141, %v350
  %v352 = vpop.f32.mrb[0].mxu0
  %v353 = vadd.f32 %v137, %v352
  %v354 = vpop.f32.mrb[0].mxu0
  %v355 = vadd.f32 %v141, %v354
  %356 = vmatprep.mubr.bf16.mxu0 0
  %357 = vmatmul.mubr.bf16.gmra.mrb[0].mxu0 %v99
  %v358 = vpop.f32.mrb[0].mxu0
  %v359 = vadd.f32 %v137, %v358
  %v360 = vpop.f32.mrb[0].mxu0
  %v361 = vadd.f32 %v141, %v360
  %v362 = vpop.f32.mrb[0].mxu0
  %v363 = vadd.f32 %v137, %v362
  %v364 = vpop.f32.mrb[0].mxu0
  %v365 = vadd.f32 %v141, %v364
  %366 = vdwg.mxu0
  %367 = vmatprep.subr.bf16.mxu0 %v253
  %368 = vmatpush1.bf16.msra.mxu0 %v252
  %369 = vmatprep.subr.bf16.mxu0 %v257
  %370 = vmatpush1.bf16.msra.mxu0 %v256
  %371 = vmatprep.subr.bf16.mxu0 %v261
  %372 = vmatpush1.bf16.msra.mxu0 %v260
  %373 = vmatprep.subr.bf16.mxu0 %v265
  %374 = vmatpush1.bf16.msra.mxu0 %v264
  %375 = vmatprep.subr.bf16.mxu0 %v269
  %376 = vmatpush1.bf16.msra.mxu0 %v268
  %377 = vmatprep.subr.bf16.mxu0 %v273
  %378 = vmatpush1.bf16.msra.mxu0 %v272
  %379 = vmatprep.subr.bf16.mxu0 %v277
  %380 = vmatpush1.bf16.msra.mxu0 %v276
  %381 = vmatprep.subr.bf16.mxu0 %v281
  %382 = vmatpush1.bf16.msra.mxu0 %v280
  %383 = vmatprep.subr.bf16.mxu0 0
  %384 = vmatpush1.bf16.msra.mxu0 0
  %385 = vmatprep.subr.bf16.mxu0 0
  %386 = vmatpush1.bf16.msra.mxu0 0
  %387 = vmatprep.subr.bf16.mxu0 0
  %388 = vmatpush1.bf16.msra.mxu0 0
  %389 = vmatprep.subr.bf16.mxu0 0
  %390 = vmatpush1.bf16.msra.mxu0 0
  %391 = vmatprep.subr.bf16.mxu0 0
  %392 = vmatpush1.bf16.msra.mxu0 0
  %393 = vmatprep.subr.bf16.mxu0 0
  %394 = vmatpush1.bf16.msra.mxu0 0
  %395 = vmatprep.subr.bf16.mxu0 0
  %396 = vmatpush1.bf16.msra.mxu0 0
  %397 = vmatprep.subr.bf16.mxu0 0
  %398 = vmatpush1.bf16.msra.mxu0 0
  %399 = vmatprep.mubr.bf16.mxu0 0
  %400 = vmatmul.mubr.bf16.gmra.mrb[0].mxu0 %v98
  %v401 = vpop.f32.mrb[0].mxu0
  %v402 = vadd.f32 %v145, %v401
  %v403 = vpop.f32.mrb[0].mxu0
  %v404 = vadd.f32 %v149, %v403
  %v405 = vpop.f32.mrb[0].mxu0
  %v406 = vadd.f32 %v145, %v405
  %v407 = vpop.f32.mrb[0].mxu0
  %v408 = vadd.f32 %v149, %v407
  %409 = vmatprep.mubr.bf16.mxu0 0
  %410 = vmatmul.mubr.bf16.gmra.mrb[0].mxu0 %v99
  %v411 = vpop.f32.mrb[0].mxu0
  %v412 = vadd.f32 %v145, %v411
  %v413 = vpop.f32.mrb[0].mxu0
  %v414 = vadd.f32 %v149, %v413
  %v415 = vpop.f32.mrb[0].mxu0
  %v416 = vadd.f32 %v145, %v415
  %v417 = vpop.f32.mrb[0].mxu0
  %v418 = vadd.f32 %v149, %v417
  %419 = vdwg.mxu0
  %v420 = vmax.f32 %v349, 0.0
  %v421 = vmax.f32 %v351, 0.0
  %v422 = vmax.f32 %v402, 0.0
  %v423 = vmax.f32 %v404, 0.0
  %v424 = vmax.f32 %v353, 0.0
  %v425 = vmax.f32 %v355, 0.0
  %v426 = vmax.f32 %v406, 0.0
  %v427 = vmax.f32 %v408, 0.0
  %v428 = vmax.f32 %v359, 0.0
  %v429 = vmax.f32 %v361, 0.0
  %v430 = vmax.f32 %v412, 0.0
  %v431 = vmax.f32 %v414, 0.0
  %v432 = vmax.f32 %v363, 0.0
  %v433 = vmax.f32 %v365, 0.0
  %v434 = vmax.f32 %v416, 0.0
  %v435 = vmax.f32 %v418, 0.0
  %v436 = vpack.c.bf16 %v424, %v420
  %v437 = vpack.c.bf16 %v425, %v421
  %v438 = vpack.c.bf16 %v426, %v422
  %v439 = vpack.c.bf16 %v427, %v423
  %v440 = vpack.c.bf16 %v432, %v428
  %v441 = vpack.c.bf16 %v433, %v429
  %v442 = vpack.c.bf16 %v434, %v430
  %v443 = vpack.c.bf16 %v435, %v431
  %v444 = vld [vmem:[%s5] sm:$0xf]
  %v445 = vld [vmem:[%s5 + $0x4] sm:$0xf]
  %v446 = vld [vmem:[%s5 + $0x8] sm:$0xf]
  %v447 = vld [vmem:[%s5 + $0xc] sm:$0xf]
  %v448 = vld [vmem:[%s5 + $0x10] sm:$0xf]
  %v449 = vld [vmem:[%s5 + $0x14] sm:$0xf]
  %v450 = vld [vmem:[%s5 + $0x18] sm:$0xf]
  %v451 = vld [vmem:[%s5 + $0x1c] sm:$0xf]
  %v452 = vld [vmem:[%s5 + $0x20] sm:$0xf]
  %v453 = vld [vmem:[%s5 + $0x24] sm:$0xf]
  %v454 = vld [vmem:[%s5 + $0x28] sm:$0xf]
  %v455 = vld [vmem:[%s5 + $0x2c] sm:$0xf]
  %v456 = vld [vmem:[%s5 + $0x30] sm:$0xf]
  %v457 = vld [vmem:[%s5 + $0x34] sm:$0xf]
  %v458 = vld [vmem:[%s5 + $0x38] sm:$0xf]
  %v459 = vld [vmem:[%s5 + $0x3c] sm:$0xf]
  %v460 = vld [vmem:[%s5 + $0x40] sm:$0xf]
  %v461 = vld [vmem:[%s5 + $0x44] sm:$0xf]
  %v462 = vld [vmem:[%s5 + $0x48] sm:$0xf]
  %v463 = vld [vmem:[%s5 + $0x4c] sm:$0xf]
  %v464 = vld [vmem:[%s5 + $0x50] sm:$0xf]
  %v465 = vld [vmem:[%s5 + $0x54] sm:$0xf]
  %v466 = vld [vmem:[%s5 + $0x58] sm:$0xf]
  %v467 = vld [vmem:[%s5 + $0x5c] sm:$0xf]
  %v468 = vld [vmem:[%s5 + $0x60] sm:$0xf]
  %v469 = vld [vmem:[%s5 + $0x64] sm:$0xf]
  %v470 = vld [vmem:[%s5 + $0x68] sm:$0xf]
  %v471 = vld [vmem:[%s5 + $0x6c] sm:$0xf]
  %v472 = vld [vmem:[%s5 + $0x70] sm:$0xf]
  %v473 = vld [vmem:[%s5 + $0x74] sm:$0xf]
  %v474 = vld [vmem:[%s5 + $0x78] sm:$0xf]
  %v475 = vld [vmem:[%s5 + $0x7c] sm:$0xf]
  %v476 = vld [vmem:[%s5 + $0x80] sm:$0xf]
  %v477 = vld [vmem:[%s5 + $0x84] sm:$0xf]
  %v478 = vld [vmem:[%s5 + $0x88] sm:$0xf]
  %v479 = vld [vmem:[%s5 + $0x8c] sm:$0xf]
  %v480 = vld [vmem:[%s5 + $0x90] sm:$0xf]
  %v481 = vld [vmem:[%s5 + $0x94] sm:$0xf]
  %v482 = vld [vmem:[%s5 + $0x98] sm:$0xf]
  %v483 = vld [vmem:[%s5 + $0x9c] sm:$0xf]
  %v484 = vld [vmem:[%s5 + $0xa0] sm:$0xf]
  %v485 = vld [vmem:[%s5 + $0xa4] sm:$0xf]
  %v486 = vld [vmem:[%s5 + $0xa8] sm:$0xf]
  %v487 = vld [vmem:[%s5 + $0xac] sm:$0xf]
  %v488 = vld [vmem:[%s5 + $0xb0] sm:$0xf]
  %v489 = vld [vmem:[%s5 + $0xb4] sm:$0xf]
  %v490 = vld [vmem:[%s5 + $0xb8] sm:$0xf]
  %v491 = vld [vmem:[%s5 + $0xbc] sm:$0xf]
  %v492 = vld [vmem:[%s5 + $0xc0] sm:$0xf]
  %v493 = vld [vmem:[%s5 + $0xc4] sm:$0xf]
  %v494 = vld [vmem:[%s5 + $0xc8] sm:$0xf]
  %v495 = vld [vmem:[%s5 + $0xcc] sm:$0xf]
  %v496 = vld [vmem:[%s5 + $0xd0] sm:$0xf]
  %v497 = vld [vmem:[%s5 + $0xd4] sm:$0xf]
  %v498 = vld [vmem:[%s5 + $0xd8] sm:$0xf]
  %v499 = vld [vmem:[%s5 + $0xdc] sm:$0xf]
  %v500 = vld [vmem:[%s5 + $0xe0] sm:$0xf]
  %v501 = vld [vmem:[%s5 + $0xe4] sm:$0xf]
  %v502 = vld [vmem:[%s5 + $0xe8] sm:$0xf]
  %v503 = vld [vmem:[%s5 + $0xec] sm:$0xf]
  %v504 = vld [vmem:[%s5 + $0xf0] sm:$0xf]
  %v505 = vld [vmem:[%s5 + $0xf4] sm:$0xf]
  %v506 = vld [vmem:[%s5 + $0xf8] sm:$0xf]
  %v507 = vld [vmem:[%s5 + $0xfc] sm:$0xf]
  %v508 = vld [vmem:[%s6] sm:$0x1]
  %v510 = vlaneseq
  %v511 = vshrl.u32 %v510, 7
  %v512 = vsub.s32 0, %v511
  %v513 = vrot.slane %v508, %v512
  %v579 = vunpack.c.l.b16 %v444
  %v580 = vunpack.c.l.b16 %v445
  %v581 = vunpack.c.l.b16 %v446
  %v582 = vunpack.c.l.b16 %v447
  %v583 = vunpack.c.l.b16 %v448
  %v584 = vunpack.c.l.b16 %v449
  %v585 = vunpack.c.l.b16 %v450
  %v586 = vunpack.c.l.b16 %v451
  %v587 = vunpack.c.l.b16 %v452
  %v588 = vunpack.c.l.b16 %v453
  %v589 = vunpack.c.l.b16 %v454
  %v590 = vunpack.c.l.b16 %v455
  %v591 = vunpack.c.l.b16 %v456
  %v592 = vunpack.c.l.b16 %v457
  %v593 = vunpack.c.l.b16 %v458
  %v594 = vunpack.c.l.b16 %v459
  %v595 = vunpack.c.l.b16 %v460
  %v596 = vunpack.c.l.b16 %v461
  %v597 = vunpack.c.l.b16 %v462
  %v598 = vunpack.c.l.b16 %v463
  %v599 = vunpack.c.l.b16 %v464
  %v600 = vunpack.c.l.b16 %v465
  %v601 = vunpack.c.l.b16 %v466
  %v602 = vunpack.c.l.b16 %v467
  %v603 = vunpack.c.l.b16 %v468
  %v604 = vunpack.c.l.b16 %v469
  %v605 = vunpack.c.l.b16 %v470
  %v606 = vunpack.c.l.b16 %v471
  %v607 = vunpack.c.l.b16 %v472
  %v608 = vunpack.c.l.b16 %v473
  %v609 = vunpack.c.l.b16 %v474
  %v610 = vunpack.c.l.b16 %v475
  %v611 = vunpack.c.l.b16 %v476
  %v612 = vunpack.c.l.b16 %v477
  %v613 = vunpack.c.l.b16 %v478
  %v614 = vunpack.c.l.b16 %v479
  %v615 = vunpack.c.l.b16 %v480
  %v616 = vunpack.c.l.b16 %v481
  %v617 = vunpack.c.l.b16 %v482
  %v618 = vunpack.c.l.b16 %v483
  %v619 = vunpack.c.l.b16 %v484
  %v620 = vunpack.c.l.b16 %v485
  %v621 = vunpack.c.l.b16 %v486
  %v622 = vunpack.c.l.b16 %v487
  %v623 = vunpack.c.l.b16 %v488
  %v624 = vunpack.c.l.b16 %v489
  %v625 = vunpack.c.l.b16 %v490
  %v626 = vunpack.c.l.b16 %v491
  %v627 = vunpack.c.l.b16 %v492
  %v628 = vunpack.c.l.b16 %v493
  %v629 = vunpack.c.l.b16 %v494
  %v630 = vunpack.c.l.b16 %v495
  %v631 = vunpack.c.l.b16 %v496
  %v632 = vunpack.c.l.b16 %v497
  %v633 = vunpack.c.l.b16 %v498
  %v634 = vunpack.c.l.b16 %v499
  %v635 = vunpack.c.l.b16 %v500
  %v636 = vunpack.c.l.b16 %v501
  %v637 = vunpack.c.l.b16 %v502
  %v638 = vunpack.c.l.b16 %v503
  %v639 = vunpack.c.l.b16 %v504
  %v640 = vunpack.c.l.b16 %v505
  %v641 = vunpack.c.l.b16 %v506
  %v642 = vunpack.c.l.b16 %v507
  %v643 = vpack.c.b16 %v580, %v579
  %v644 = vpack.c.b16 %v582, %v581
  %v645 = vpack.c.b16 %v584, %v583
  %v646 = vpack.c.b16 %v586, %v585
  %v647 = vpack.c.b16 %v588, %v587
  %v648 = vpack.c.b16 %v590, %v589
  %v649 = vpack.c.b16 %v592, %v591
  %v650 = vpack.c.b16 %v594, %v593
  %v651 = vpack.c.b16 %v596, %v595
  %v652 = vpack.c.b16 %v598, %v597
  %v653 = vpack.c.b16 %v600, %v599
  %v654 = vpack.c.b16 %v602, %v601
  %v655 = vpack.c.b16 %v604, %v603
  %v656 = vpack.c.b16 %v606, %v605
  %v657 = vpack.c.b16 %v608, %v607
  %v658 = vpack.c.b16 %v610, %v609
  %v659 = vpack.c.b16 %v612, %v611
  %v660 = vpack.c.b16 %v614, %v613
  %v661 = vpack.c.b16 %v616, %v615
  %v662 = vpack.c.b16 %v618, %v617
  %v663 = vpack.c.b16 %v620, %v619
  %v664 = vpack.c.b16 %v622, %v621
  %v665 = vpack.c.b16 %v624, %v623
  %v666 = vpack.c.b16 %v626, %v625
  %v667 = vpack.c.b16 %v628, %v627
  %v668 = vpack.c.b16 %v630, %v629
  %v669 = vpack.c.b16 %v632, %v631
  %v670 = vpack.c.b16 %v634, %v633
  %v671 = vpack.c.b16 %v636, %v635
  %v672 = vpack.c.b16 %v638, %v637
  %v673 = vpack.c.b16 %v640, %v639
  %v674 = vpack.c.b16 %v642, %v641
  %707 = vmatprep.subr.bf16.mxu0 0
  %708 = vmatpush1.bf16.msra.mxu0 %v643
  %709 = vmatprep.subr.bf16.mxu0 0
  %710 = vmatpush1.bf16.msra.mxu0 %v644
  %711 = vmatprep.subr.bf16.mxu0 0
  %712 = vmatpush1.bf16.msra.mxu0 %v645
  %713 = vmatprep.subr.bf16.mxu0 0
  %714 = vmatpush1.bf16.msra.mxu0 %v646
  %715 = vmatprep.subr.bf16.mxu0 0
  %716 = vmatpush1.bf16.msra.mxu0 %v647
  %717 = vmatprep.subr.bf16.mxu0 0
  %718 = vmatpush1.bf16.msra.mxu0 %v648
  %719 = vmatprep.subr.bf16.mxu0 0
  %720 = vmatpush1.bf16.msra.mxu0 %v649
  %721 = vmatprep.subr.bf16.mxu0 0
  %722 = vmatpush1.bf16.msra.mxu0 %v650
  %723 = vmatprep.subr.bf16.mxu0 0
  %724 = vmatpush1.bf16.msra.mxu0 %v651
  %725 = vmatprep.subr.bf16.mxu0 0
  %726 = vmatpush1.bf16.msra.mxu0 %v652
  %727 = vmatprep.subr.bf16.mxu0 0
  %728 = vmatpush1.bf16.msra.mxu0 %v653
  %729 = vmatprep.subr.bf16.mxu0 0
  %730 = vmatpush1.bf16.msra.mxu0 %v654
  %731 = vmatprep.subr.bf16.mxu0 0
  %732 = vmatpush1.bf16.msra.mxu0 %v655
  %733 = vmatprep.subr.bf16.mxu0 0
  %734 = vmatpush1.bf16.msra.mxu0 %v656
  %735 = vmatprep.subr.bf16.mxu0 0
  %736 = vmatpush1.bf16.msra.mxu0 %v657
  %737 = vmatprep.subr.bf16.mxu0 0
  %738 = vmatpush1.bf16.msra.mxu0 %v658
  %739 = vmatprep.mubr.bf16.mxu0 %v437
  %740 = vmatmul.mubr.bf16.gmra.mrb[0].mxu0 %v436
  %v741 = vpop.f32.mrb[0].mxu0
  %v742 = vadd.f32 %v513, %v741
  %v743 = vpop.f32.mrb[0].mxu0
  %v744 = vpop.f32.mrb[0].mxu0
  %v745 = vadd.f32 %v513, %v744
  %v746 = vpop.f32.mrb[0].mxu0
  %747 = vmatprep.mubr.bf16.mxu0 %v441
  %748 = vmatmul.mubr.bf16.gmra.mrb[0].mxu0 %v440
  %v749 = vpop.f32.mrb[0].mxu0
  %v750 = vadd.f32 %v513, %v749
  %v751 = vpop.f32.mrb[0].mxu0
  %v752 = vpop.f32.mrb[0].mxu0
  %v753 = vadd.f32 %v513, %v752
  %v754 = vpop.f32.mrb[0].mxu0
  %755 = vdwg.mxu0
  %756 = vmatprep.subr.bf16.mxu0 0
  %757 = vmatpush1.bf16.msra.mxu0 %v659
  %758 = vmatprep.subr.bf16.mxu0 0
  %759 = vmatpush1.bf16.msra.mxu0 %v660
  %760 = vmatprep.subr.bf16.mxu0 0
  %761 = vmatpush1.bf16.msra.mxu0 %v661
  %762 = vmatprep.subr.bf16.mxu0 0
  %763 = vmatpush1.bf16.msra.mxu0 %v662
  %764 = vmatprep.subr.bf16.mxu0 0
  %765 = vmatpush1.bf16.msra.mxu0 %v663
  %766 = vmatprep.subr.bf16.mxu0 0
  %767 = vmatpush1.bf16.msra.mxu0 %v664
  %768 = vmatprep.subr.bf16.mxu0 0
  %769 = vmatpush1.bf16.msra.mxu0 %v665
  %770 = vmatprep.subr.bf16.mxu0 0
  %771 = vmatpush1.bf16.msra.mxu0 %v666
  %772 = vmatprep.subr.bf16.mxu0 0
  %773 = vmatpush1.bf16.msra.mxu0 %v667
  %774 = vmatprep.subr.bf16.mxu0 0
  %775 = vmatpush1.bf16.msra.mxu0 %v668
  %776 = vmatprep.subr.bf16.mxu0 0
  %777 = vmatpush1.bf16.msra.mxu0 %v669
  %778 = vmatprep.subr.bf16.mxu0 0
  %779 = vmatpush1.bf16.msra.mxu0 %v670
  %780 = vmatprep.subr.bf16.mxu0 0
  %781 = vmatpush1.bf16.msra.mxu0 %v671
  %782 = vmatprep.subr.bf16.mxu0 0
  %783 = vmatpush1.bf16.msra.mxu0 %v672
  %784 = vmatprep.subr.bf16.mxu0 0
  %785 = vmatpush1.bf16.msra.mxu0 %v673
  %786 = vmatprep.subr.bf16.mxu0 0
  %787 = vmatpush1.bf16.msra.mxu0 %v674
  %788 = vmatprep.mubr.bf16.mxu0 %v439
  %789 = vmatmul.mubr.bf16.gmra.mrb[0].mxu0 %v438
  %v790 = vpop.f32.mrb[0].mxu0
  %v791 = vadd.f32 %v742, %v790
  %v792 = vpop.f32.mrb[0].mxu0
  %v793 = vpop.f32.mrb[0].mxu0
  %v794 = vadd.f32 %v745, %v793
  %v795 = vpop.f32.mrb[0].mxu0
  %796 = vmatprep.mubr.bf16.mxu0 %v443
  %797 = vmatmul.mubr.bf16.gmra.mrb[0].mxu0 %v442
  %v798 = vpop.f32.mrb[0].mxu0
  %v799 = vadd.f32 %v750, %v798
  %v800 = vpop.f32.mrb[0].mxu0
  %v801 = vpop.f32.mrb[0].mxu0
  %v802 = vadd.f32 %v753, %v801
  %v803 = vpop.f32.mrb[0].mxu0
  %804 = vdwg.mxu0
  %v805 = vadd.f32 %v791, %v27
  %v806 = vadd.f32 %v794, %v28
  %v807 = vadd.f32 %v799, %v29
  %v808 = vadd.f32 %v802, %v30
  %809 = vst [vmem:[%s7] sm:$0xff] %v805
  %810 = vst [vmem:[%s7 + $0x8] sm:$0xff] %v806
  %811 = vst [vmem:[%s7 + $0x10] sm:$0xff] %v807
  %812 = vst [vmem:[%s7 + $0x18] sm:$0xff] %v808
  // Predicated region
  $region30: #{positionwise_ffn.1} parent=0 // pred_check
    _
  $region31: #{positionwise_ffn.1} parent=0 // pred_check_branch
    %814 = sbr.rel (0) target = $region33
  $region32: #{positionwise_ffn.1} parent=0 // pred_region
    _
  $region33: #{positionwise_ffn.1} parent=0 // pred_fallthru
    _
  // Predicated region
  $region34: #{positionwise_ffn.1} parent=0 // pred_check
    _
  $region35: #{positionwise_ffn.1} parent=0 // pred_check_branch
    %816 = sbr.rel (0) target = $region37
  $region36: #{positionwise_ffn.1} parent=0 // pred_region
    _
  $region37: #{positionwise_ffn.1} parent=0 // pred_fallthru
    _

</llo_original>
